<compile_context>
chip_gen: v6e
topology: v6e:2x2x1
jax: 0.10.0
libtpu: 0.0.40
codegen_flags: <defaults>
</compile_context>

<pallas_src>
import functools

import jax
import jax.numpy as jnp
from jax import lax
from jax.experimental import pallas as pl
from jax.experimental.pallas import tpu as pltpu

EPS = 1e-5


def _round_up(x, m):
    return (x + m - 1) // m * m


def _fused_block_kernel(x_ref, w_ref, g_ref, b_ref, mask_ref, o_ref, act_ref,
                        *, N, H, W, C0, F, n_layers, pad):
    """One grid step = one conv layer of the residual block.

    Layout: channels on sublanes, flattened N*H*W on lanes (lane-dense).

    x_ref:    (F, NHW)             f32  channel-major input (channels padded C0->F)
    w_ref:    (9, F, F)            bf16 this layer's weights, [tap, c_out, c_in]
    g_ref:    (F, 1)               f32  BN gamma (dummy entry for the last layer)
    b_ref:    (F, 1)               f32  BN beta  (dummy entry for the last layer)
    mask_ref: (9, NHW)             f32  3x3 tap validity masks (halo handling)
    o_ref:    (C0, NHW)            f32  x + block(x), written at the last layer only
    act_ref:  (F, pad+NHW+pad)     f32  lane-padded activation scratch (persistent)
    """
    NHW = N * H * W
    inv_nhw = 1.0 / NHW
    layer = pl.program_id(0)
    last = n_layers - 1

    @pl.when(layer == 0)
    def _init():
        # Zero only the two lane-aligned halo slabs (once); the interior is
        # (re)written every layer.
        halo = jnp.zeros((F, pad), jnp.float32)
        act_ref[:, :pad] = halo
        act_ref[:, pad + NHW:] = halo
        act_ref[:, pad:pad + NHW] = x_ref[...]

    # 3x3 conv = 9 accumulating MXU matmuls (F,F)@(F,NHW).  Taps are static
    # lane-offset views of the padded flat activation; the masks zero positions
    # whose 3x3 neighbour falls outside the image (row / image boundary bleed in
    # the flattened layout).  No im2col buffer, every operand is lane-dense.
    y = None
    for k in range(9):
        dy, dx = k // 3, k % 3
        off = (dy - 1) * W + (dx - 1)
        tap = act_ref[:, pad + off:pad + off + NHW]            # (F, NHW) f32
        if off != 0:
            tap = tap * mask_ref[k:k + 1, :]
        d = jnp.dot(w_ref[k], tap.astype(jnp.bfloat16),
                    preferred_element_type=jnp.float32)        # (F, NHW) f32
        y = d if y is None else y + d

    @pl.when(layer != last)
    def _bn_relu():
        # BatchNorm2d (training mode): biased batch stats over (N,H,W) = lane axis,
        # fused sum / sum-of-squares pass (XLU lane reduces), then affine + ReLU.
        s = jnp.sum(y, axis=-1, keepdims=True)                 # (F, 1)
        s2 = jnp.sum(y * y, axis=-1, keepdims=True)            # (F, 1)
        mean = s * inv_nhw
        var = s2 * inv_nhw - mean * mean
        scale = lax.rsqrt(var + EPS) * g_ref[...]              # (F, 1)
        shift = b_ref[...] - mean * scale
        act_ref[:, pad:pad + NHW] = jnp.maximum(y * scale + shift, 0.0)

    @pl.when(layer == last)
    def _residual():
        # Last conv has no BN/ReLU; residual add against the untouched f32 input.
        # Only the first C0 output channels are real (weights zero-padded beyond).
        o_ref[...] = x_ref[:C0, :] + y[:C0, :]


def feature_network_cnn(x_nchw, convs, gammas, betas):
    """Forward pass of FeatureNetwork_CNN: x + block(x), BN in training mode."""
    x_nchw = x_nchw.astype(jnp.float32)
    N, C0, H, W = x_nchw.shape
    F = convs[0].shape[-1]                                     # filters
    n_layers = len(convs)
    NHW = N * H * W
    pad = _round_up(W + 1, 128)                                # lane-aligned halo

    # ---- glue-side layout plumbing (channel-major, lane-dense NHW) --------------
    x_cm = jnp.transpose(x_nchw, (1, 0, 2, 3)).reshape(C0, NHW)
    x_cm = jnp.pad(x_cm, ((0, F - C0), (0, 0)))                # (F, NHW)

    # Conv weights HWIO (3,3,ci,co) -> (9, co, ci), zero-padded to (9, F, F), bf16.
    w_list = []
    for w in convs:
        cin, cout = w.shape[2], w.shape[3]
        wp = jnp.pad(w, ((0, 0), (0, 0), (0, F - cin), (0, F - cout)))
        w_list.append(jnp.transpose(wp, (0, 1, 3, 2)).reshape(9, F, F))
    w_all = jnp.stack(w_list, axis=0).astype(jnp.bfloat16)     # (L, 9, F, F)

    # BN affine params as (F,1) columns; dummy last entry keeps per-layer indexing
    # in range (the last layer has no BN and never reads it).
    g_all = jnp.stack(list(gammas) + [jnp.ones((F,), jnp.float32)]
                      ).astype(jnp.float32).reshape(n_layers, F, 1)
    b_all = jnp.stack(list(betas) + [jnp.zeros((F,), jnp.float32)]
                      ).astype(jnp.float32).reshape(n_layers, F, 1)

    # 3x3 tap validity masks over the flattened (n-major, h, w) lane axis.
    hh = jnp.arange(H)[:, None]
    ww = jnp.arange(W)[None, :]
    masks = []
    for k in range(9):
        dy, dx = k // 3, k % 3
        m = ((hh + dy - 1 >= 0) & (hh + dy - 1 < H) &
             (ww + dx - 1 >= 0) & (ww + dx - 1 < W)).astype(jnp.float32)
        masks.append(jnp.tile(m.reshape(-1), N))
    mask_all = jnp.stack(masks, axis=0)                        # (9, NHW)

    # ---- tile-padded VMEM accounting ((8,128) f32 / (16,128) bf16 tiles) --------
    def tiled_bytes(shape, dtype):
        itemsize = jnp.dtype(dtype).itemsize
        sub = {4: 8, 2: 16, 1: 32}[itemsize]
        s = (1,) * max(0, 2 - len(shape)) + tuple(shape)
        lead = 1
        for d in s[:-2]:
            lead *= d
        return lead * _round_up(s[-2], sub) * _round_up(s[-1], 128) * itemsize

    est_bytes = (
        2 * tiled_bytes((F, NHW), jnp.float32)            # x (double-buffered)
        + 2 * tiled_bytes((9, F, F), jnp.bfloat16)        # per-layer weights
        + 4 * tiled_bytes((F, 1), jnp.float32)            # gamma + beta
        + 2 * tiled_bytes((9, NHW), jnp.float32)          # masks
        + 2 * tiled_bytes((C0, NHW), jnp.float32)         # output
        + tiled_bytes((F, pad + NHW + pad), jnp.float32)  # activation scratch
        + 8 * tiled_bytes((F, NHW), jnp.float32))         # y / tap / BN temporaries
    # Must fit the smallest default scoped VMEM (16 MiB on v5e; v7x: 64 MiB phys/TC).
    # TODO(synk): tiled (NHW-blocked, two-pass-BN) fallback + v7x two-core BN split.
    vmem_budget = 16 * 1024 * 1024
    assert est_bytes < vmem_budget - 2 * 1024 * 1024, est_bytes

    kernel = functools.partial(_fused_block_kernel, N=N, H=H, W=W, C0=C0, F=F,
                               n_layers=n_layers, pad=pad)
    out_cm = pl.pallas_call(
        kernel,
        out_shape=jax.ShapeDtypeStruct((C0, NHW), jnp.float32),
        grid=(n_layers,),
        in_specs=[
            pl.BlockSpec((F, NHW), lambda l: (0, 0)),            # input (resident)
            pl.BlockSpec((None, 9, F, F), lambda l: (l, 0, 0, 0)),  # per-layer W
            pl.BlockSpec((None, F, 1), lambda l: (l, 0, 0)),     # per-layer gamma
            pl.BlockSpec((None, F, 1), lambda l: (l, 0, 0)),     # per-layer beta
            pl.BlockSpec((9, NHW), lambda l: (0, 0)),            # masks (resident)
        ],
        out_specs=pl.BlockSpec((C0, NHW), lambda l: (0, 0)),
        scratch_shapes=[pltpu.VMEM((F, pad + NHW + pad), jnp.float32)],
        compiler_params=pltpu.CompilerParams(
            dimension_semantics=("arbitrary",),
            vmem_limit_bytes=vmem_budget),
    )(x_cm, w_all, g_all, b_all, mask_all)

    return jnp.transpose(out_cm.reshape(C0, N, H, W), (1, 0, 2, 3))   # -> NCHW


def reference_forward(x_nchw, convs, gammas, betas):
    """Pure-JAX reference matching the PyTorch module's forward (training-mode BN)."""
    x = jnp.transpose(x_nchw, (0, 2, 3, 1)).astype(jnp.float32)
    h = x
    n_layers = len(convs)
    for i, w in enumerate(convs):
        y = lax.conv_general_dilated(
            h, w, window_strides=(1, 1), padding="SAME",
            dimension_numbers=("NHWC", "HWIO", "NHWC"),
            precision=lax.Precision.HIGHEST)
        if i == n_layers - 1:
            return jnp.transpose(x + y, (0, 3, 1, 2))
        mean = jnp.mean(y, axis=(0, 1, 2))
        var = jnp.mean(jnp.square(y - mean), axis=(0, 1, 2))
        y = (y - mean) * lax.rsqrt(var + EPS) * gammas[i] + betas[i]
        h = jnp.maximum(y, 0.0)


def make_params(key, image_channels=2, filters=32, depth=5):
    """Deterministic synthetic parameters matching the module's __init__ shapes."""
    convs, gammas, betas = [], [], []
    for i in range(depth - 1):
        cin = image_channels if i == 0 else filters
        key, kw, kg, kb = jax.random.split(key, 4)
        convs.append(0.1 * jax.random.normal(kw, (3, 3, cin, filters), jnp.float32))
        gammas.append(1.0 + 0.05 * jax.random.normal(kg, (filters,), jnp.float32))
        betas.append(0.05 * jax.random.normal(kb, (filters,), jnp.float32))
    key, kw = jax.random.split(key)
    convs.append(0.1 * jax.random.normal(kw, (3, 3, filters, image_channels), jnp.float32))
    return convs, gammas, betas


if __name__ == "__main__":
    key = jax.random.PRNGKey(0)
    key, kx = jax.random.split(key)

    image_channels, filters, depth = 2, 32, 5
    convs, gammas, betas = make_params(key, image_channels, filters, depth)

    # Small input consistent with the module (NCHW, like PyTorch).
    x = jax.random.normal(kx, (2, image_channels, 16, 16), jnp.float32)

    out = jax.jit(feature_network_cnn)(x, convs, gammas, betas)
    out = jax.block_until_ready(out)

    ref = reference_forward(x, convs, gammas, betas)
    assert out.shape == x.shape
    # bf16 MXU inputs (f32 accumulation) vs. the f32 HIGHEST-precision reference.
    assert jnp.allclose(out, ref, atol=3e-2, rtol=3e-2), \
        float(jnp.max(jnp.abs(out - ref)))

    print("KERNEL_OK")
</pallas_src>

<mosaic_0001>
module attributes {stable_mosaic.version = 11 : i64} {
  func.func @_fused_block_kernel(%arg0: i32, %arg1: memref<32x512xf32, #tpu.memory_space<vmem>>, %arg2: memref<1x9x32x32xbf16, #tpu.memory_space<vmem>>, %arg3: memref<1x32x1xf32, #tpu.memory_space<vmem>>, %arg4: memref<1x32x1xf32, #tpu.memory_space<vmem>>, %arg5: memref<9x512xf32, #tpu.memory_space<vmem>>, %arg6: memref<2x512xf32, #tpu.memory_space<vmem>>, %arg7: memref<32x768xf32, #tpu.memory_space<vmem>>) attributes {dimension_semantics = [#tpu.dimension_semantics<arbitrary>], iteration_bounds = array<i64: 5>, scalar_prefetch = 0 : i64, scratch_operands = 1 : i64, tpu.core_type = #tpu.core_type<tc>, window_params = [{pipeline_mode = #tpu.pipeline_mode<synchronous>, transform_indices = @transform_0, window_bounds = array<i64: 32, 512>}, {transform_indices = @transform_1, window_bounds = array<i64: 1, 9, 32, 32>}, {transform_indices = @transform_2, window_bounds = array<i64: 1, 32, 1>}, {transform_indices = @transform_3, window_bounds = array<i64: 1, 32, 1>}, {pipeline_mode = #tpu.pipeline_mode<synchronous>, transform_indices = @transform_4, window_bounds = array<i64: 9, 512>}, {pipeline_mode = #tpu.pipeline_mode<synchronous>, transform_indices = @transform_5, window_bounds = array<i64: 2, 512>}]} {
    %c0_i32 = arith.constant 0 : i32
    %0 = arith.cmpi eq, %arg0, %c0_i32 : i32
    %1 = arith.extui %0 : i1 to i32
    %c0_i32_0 = arith.constant 0 : i32
    %2 = arith.cmpi ne, %1, %c0_i32_0 : i32
    scf.if %2 {
      %cst_64 = arith.constant 0.000000e+00 : f32
      %86 = vector.broadcast %cst_64 : f32 to vector<32x128xf32>
      %c0_65 = arith.constant 0 : index
      %c0_66 = arith.constant 0 : index
      %87 = vector.load %arg7[%c0_65, %c0_66] : memref<32x768xf32, #tpu.memory_space<vmem>>, vector<32x128xf32>
      tpu.vector_store %arg7[%c0_65, %c0_66], %86 {strides = array<i32>} : memref<32x768xf32, #tpu.memory_space<vmem>>, vector<32x128xf32>,
      %c0_67 = arith.constant 0 : index
      %c640 = arith.constant 640 : index
      %88 = vector.load %arg7[%c0_67, %c640] : memref<32x768xf32, #tpu.memory_space<vmem>>, vector<32x128xf32>
      tpu.vector_store %arg7[%c0_67, %c640], %86 {strides = array<i32>} : memref<32x768xf32, #tpu.memory_space<vmem>>, vector<32x128xf32>,
      %c0_68 = arith.constant 0 : index
      %c0_69 = arith.constant 0 : index
      %89 = vector.load %arg1[%c0_68, %c0_69] : memref<32x512xf32, #tpu.memory_space<vmem>>, vector<32x512xf32>
      %c0_70 = arith.constant 0 : index
      %c128_71 = arith.constant 128 : index
      %90 = vector.load %arg7[%c0_70, %c128_71] : memref<32x768xf32, #tpu.memory_space<vmem>>, vector<32x512xf32>
      tpu.vector_store %arg7[%c0_70, %c128_71], %89 {strides = array<i32>} : memref<32x768xf32, #tpu.memory_space<vmem>>, vector<32x512xf32>,
    } else {
    }
    %c0 = arith.constant 0 : index
    %c111 = arith.constant 111 : index
    %3 = vector.load %arg7[%c0, %c111] : memref<32x768xf32, #tpu.memory_space<vmem>>, vector<32x512xf32>
    %c0_1 = arith.constant 0 : index
    %c0_2 = arith.constant 0 : index
    %4 = vector.load %arg5[%c0_1, %c0_2] : memref<9x512xf32, #tpu.memory_space<vmem>>, vector<1x512xf32>
    %5 = vector.broadcast %4 : vector<1x512xf32> to vector<32x512xf32>
    %6 = arith.mulf %3, %5 : vector<32x512xf32>
    %c0_3 = arith.constant 0 : index
    %c0_4 = arith.constant 0 : index
    %c0_5 = arith.constant 0 : index
    %c0_6 = arith.constant 0 : index
    %7 = vector.load %arg2[%c0_3, %c0_4, %c0_5, %c0_6] : memref<1x9x32x32xbf16, #tpu.memory_space<vmem>>, vector<1x1x32x32xbf16>
    %8 = vector.shape_cast %7 : vector<1x1x32x32xbf16> to vector<32x32xbf16>
    %9 = arith.truncf %6 : vector<32x512xf32> to vector<32x512xbf16>
    %cst = arith.constant dense<0.000000e+00> : vector<32x512xf32>
    %10 = tpu.matmul %8, %9, %cst {dimension_numbers = #tpu.dot_dimension_numbers<[1], [0], [0], [1], [0, 0, 1, 1], [], []>} : vector<32x32xbf16>, vector<32x512xbf16>, vector<32x512xf32> -> vector<32x512xf32>
    %c0_7 = arith.constant 0 : index
    %c112 = arith.constant 112 : index
    %11 = vector.load %arg7[%c0_7, %c112] : memref<32x768xf32, #tpu.memory_space<vmem>>, vector<32x512xf32>
    %c1 = arith.constant 1 : index
    %c0_8 = arith.constant 0 : index
    %12 = vector.load %arg5[%c1, %c0_8] : memref<9x512xf32, #tpu.memory_space<vmem>>, vector<1x512xf32>
    %13 = vector.broadcast %12 : vector<1x512xf32> to vector<32x512xf32>
    %14 = arith.mulf %11, %13 : vector<32x512xf32>
    %c0_9 = arith.constant 0 : index
    %c1_10 = arith.constant 1 : index
    %c0_11 = arith.constant 0 : index
    %c0_12 = arith.constant 0 : index
    %15 = vector.load %arg2[%c0_9, %c1_10, %c0_11, %c0_12] : memref<1x9x32x32xbf16, #tpu.memory_space<vmem>>, vector<1x1x32x32xbf16>
    %16 = vector.shape_cast %15 : vector<1x1x32x32xbf16> to vector<32x32xbf16>
    %17 = arith.truncf %14 : vector<32x512xf32> to vector<32x512xbf16>
    %cst_13 = arith.constant dense<0.000000e+00> : vector<32x512xf32>
    %18 = tpu.matmul %16, %17, %cst_13 {dimension_numbers = #tpu.dot_dimension_numbers<[1], [0], [0], [1], [0, 0, 1, 1], [], []>} : vector<32x32xbf16>, vector<32x512xbf16>, vector<32x512xf32> -> vector<32x512xf32>
    %19 = arith.addf %10, %18 : vector<32x512xf32>
    %c0_14 = arith.constant 0 : index
    %c113 = arith.constant 113 : index
    %20 = vector.load %arg7[%c0_14, %c113] : memref<32x768xf32, #tpu.memory_space<vmem>>, vector<32x512xf32>
    %c2 = arith.constant 2 : index
    %c0_15 = arith.constant 0 : index
    %21 = vector.load %arg5[%c2, %c0_15] : memref<9x512xf32, #tpu.memory_space<vmem>>, vector<1x512xf32>
    %22 = vector.broadcast %21 : vector<1x512xf32> to vector<32x512xf32>
    %23 = arith.mulf %20, %22 : vector<32x512xf32>
    %c0_16 = arith.constant 0 : index
    %c2_17 = arith.constant 2 : index
    %c0_18 = arith.constant 0 : index
    %c0_19 = arith.constant 0 : index
    %24 = vector.load %arg2[%c0_16, %c2_17, %c0_18, %c0_19] : memref<1x9x32x32xbf16, #tpu.memory_space<vmem>>, vector<1x1x32x32xbf16>
    %25 = vector.shape_cast %24 : vector<1x1x32x32xbf16> to vector<32x32xbf16>
    %26 = arith.truncf %23 : vector<32x512xf32> to vector<32x512xbf16>
    %cst_20 = arith.constant dense<0.000000e+00> : vector<32x512xf32>
    %27 = tpu.matmul %25, %26, %cst_20 {dimension_numbers = #tpu.dot_dimension_numbers<[1], [0], [0], [1], [0, 0, 1, 1], [], []>} : vector<32x32xbf16>, vector<32x512xbf16>, vector<32x512xf32> -> vector<32x512xf32>
    %28 = arith.addf %19, %27 : vector<32x512xf32>
    %c0_21 = arith.constant 0 : index
    %c127 = arith.constant 127 : index
    %29 = vector.load %arg7[%c0_21, %c127] : memref<32x768xf32, #tpu.memory_space<vmem>>, vector<32x512xf32>
    %c3 = arith.constant 3 : index
    %c0_22 = arith.constant 0 : index
    %30 = vector.load %arg5[%c3, %c0_22] : memref<9x512xf32, #tpu.memory_space<vmem>>, vector<1x512xf32>
    %31 = vector.broadcast %30 : vector<1x512xf32> to vector<32x512xf32>
    %32 = arith.mulf %29, %31 : vector<32x512xf32>
    %c0_23 = arith.constant 0 : index
    %c3_24 = arith.constant 3 : index
    %c0_25 = arith.constant 0 : index
    %c0_26 = arith.constant 0 : index
    %33 = vector.load %arg2[%c0_23, %c3_24, %c0_25, %c0_26] : memref<1x9x32x32xbf16, #tpu.memory_space<vmem>>, vector<1x1x32x32xbf16>
    %34 = vector.shape_cast %33 : vector<1x1x32x32xbf16> to vector<32x32xbf16>
    %35 = arith.truncf %32 : vector<32x512xf32> to vector<32x512xbf16>
    %cst_27 = arith.constant dense<0.000000e+00> : vector<32x512xf32>
    %36 = tpu.matmul %34, %35, %cst_27 {dimension_numbers = #tpu.dot_dimension_numbers<[1], [0], [0], [1], [0, 0, 1, 1], [], []>} : vector<32x32xbf16>, vector<32x512xbf16>, vector<32x512xf32> -> vector<32x512xf32>
    %37 = arith.addf %28, %36 : vector<32x512xf32>
    %c0_28 = arith.constant 0 : index
    %c128 = arith.constant 128 : index
    %38 = vector.load %arg7[%c0_28, %c128] : memref<32x768xf32, #tpu.memory_space<vmem>>, vector<32x512xf32>
    %c0_29 = arith.constant 0 : index
    %c4 = arith.constant 4 : index
    %c0_30 = arith.constant 0 : index
    %c0_31 = arith.constant 0 : index
    %39 = vector.load %arg2[%c0_29, %c4, %c0_30, %c0_31] : memref<1x9x32x32xbf16, #tpu.memory_space<vmem>>, vector<1x1x32x32xbf16>
    %40 = vector.shape_cast %39 : vector<1x1x32x32xbf16> to vector<32x32xbf16>
    %41 = arith.truncf %38 : vector<32x512xf32> to vector<32x512xbf16>
    %cst_32 = arith.constant dense<0.000000e+00> : vector<32x512xf32>
    %42 = tpu.matmul %40, %41, %cst_32 {dimension_numbers = #tpu.dot_dimension_numbers<[1], [0], [0], [1], [0, 0, 1, 1], [], []>} : vector<32x32xbf16>, vector<32x512xbf16>, vector<32x512xf32> -> vector<32x512xf32>
    %43 = arith.addf %37, %42 : vector<32x512xf32>
    %c0_33 = arith.constant 0 : index
    %c129 = arith.constant 129 : index
    %44 = vector.load %arg7[%c0_33, %c129] : memref<32x768xf32, #tpu.memory_space<vmem>>, vector<32x512xf32>
    %c5 = arith.constant 5 : index
    %c0_34 = arith.constant 0 : index
    %45 = vector.load %arg5[%c5, %c0_34] : memref<9x512xf32, #tpu.memory_space<vmem>>, vector<1x512xf32>
    %46 = vector.broadcast %45 : vector<1x512xf32> to vector<32x512xf32>
    %47 = arith.mulf %44, %46 : vector<32x512xf32>
    %c0_35 = arith.constant 0 : index
    %c5_36 = arith.constant 5 : index
    %c0_37 = arith.constant 0 : index
    %c0_38 = arith.constant 0 : index
    %48 = vector.load %arg2[%c0_35, %c5_36, %c0_37, %c0_38] : memref<1x9x32x32xbf16, #tpu.memory_space<vmem>>, vector<1x1x32x32xbf16>
    %49 = vector.shape_cast %48 : vector<1x1x32x32xbf16> to vector<32x32xbf16>
    %50 = arith.truncf %47 : vector<32x512xf32> to vector<32x512xbf16>
    %cst_39 = arith.constant dense<0.000000e+00> : vector<32x512xf32>
    %51 = tpu.matmul %49, %50, %cst_39 {dimension_numbers = #tpu.dot_dimension_numbers<[1], [0], [0], [1], [0, 0, 1, 1], [], []>} : vector<32x32xbf16>, vector<32x512xbf16>, vector<32x512xf32> -> vector<32x512xf32>
    %52 = arith.addf %43, %51 : vector<32x512xf32>
    %c0_40 = arith.constant 0 : index
    %c143 = arith.constant 143 : index
    %53 = vector.load %arg7[%c0_40, %c143] : memref<32x768xf32, #tpu.memory_space<vmem>>, vector<32x512xf32>
    %c6 = arith.constant 6 : index
    %c0_41 = arith.constant 0 : index
    %54 = vector.load %arg5[%c6, %c0_41] : memref<9x512xf32, #tpu.memory_space<vmem>>, vector<1x512xf32>
    %55 = vector.broadcast %54 : vector<1x512xf32> to vector<32x512xf32>
    %56 = arith.mulf %53, %55 : vector<32x512xf32>
    %c0_42 = arith.constant 0 : index
    %c6_43 = arith.constant 6 : index
    %c0_44 = arith.constant 0 : index
    %c0_45 = arith.constant 0 : index
    %57 = vector.load %arg2[%c0_42, %c6_43, %c0_44, %c0_45] : memref<1x9x32x32xbf16, #tpu.memory_space<vmem>>, vector<1x1x32x32xbf16>
    %58 = vector.shape_cast %57 : vector<1x1x32x32xbf16> to vector<32x32xbf16>
    %59 = arith.truncf %56 : vector<32x512xf32> to vector<32x512xbf16>
    %cst_46 = arith.constant dense<0.000000e+00> : vector<32x512xf32>
    %60 = tpu.matmul %58, %59, %cst_46 {dimension_numbers = #tpu.dot_dimension_numbers<[1], [0], [0], [1], [0, 0, 1, 1], [], []>} : vector<32x32xbf16>, vector<32x512xbf16>, vector<32x512xf32> -> vector<32x512xf32>
    %61 = arith.addf %52, %60 : vector<32x512xf32>
    %c0_47 = arith.constant 0 : index
    %c144 = arith.constant 144 : index
    %62 = vector.load %arg7[%c0_47, %c144] : memref<32x768xf32, #tpu.memory_space<vmem>>, vector<32x512xf32>
    %c7 = arith.constant 7 : index
    %c0_48 = arith.constant 0 : index
    %63 = vector.load %arg5[%c7, %c0_48] : memref<9x512xf32, #tpu.memory_space<vmem>>, vector<1x512xf32>
    %64 = vector.broadcast %63 : vector<1x512xf32> to vector<32x512xf32>
    %65 = arith.mulf %62, %64 : vector<32x512xf32>
    %c0_49 = arith.constant 0 : index
    %c7_50 = arith.constant 7 : index
    %c0_51 = arith.constant 0 : index
    %c0_52 = arith.constant 0 : index
    %66 = vector.load %arg2[%c0_49, %c7_50, %c0_51, %c0_52] : memref<1x9x32x32xbf16, #tpu.memory_space<vmem>>, vector<1x1x32x32xbf16>
    %67 = vector.shape_cast %66 : vector<1x1x32x32xbf16> to vector<32x32xbf16>
    %68 = arith.truncf %65 : vector<32x512xf32> to vector<32x512xbf16>
    %cst_53 = arith.constant dense<0.000000e+00> : vector<32x512xf32>
    %69 = tpu.matmul %67, %68, %cst_53 {dimension_numbers = #tpu.dot_dimension_numbers<[1], [0], [0], [1], [0, 0, 1, 1], [], []>} : vector<32x32xbf16>, vector<32x512xbf16>, vector<32x512xf32> -> vector<32x512xf32>
    %70 = arith.addf %61, %69 : vector<32x512xf32>
    %c0_54 = arith.constant 0 : index
    %c145 = arith.constant 145 : index
    %71 = vector.load %arg7[%c0_54, %c145] : memref<32x768xf32, #tpu.memory_space<vmem>>, vector<32x512xf32>
    %c8 = arith.constant 8 : index
    %c0_55 = arith.constant 0 : index
    %72 = vector.load %arg5[%c8, %c0_55] : memref<9x512xf32, #tpu.memory_space<vmem>>, vector<1x512xf32>
    %73 = vector.broadcast %72 : vector<1x512xf32> to vector<32x512xf32>
    %74 = arith.mulf %71, %73 : vector<32x512xf32>
    %c0_56 = arith.constant 0 : index
    %c8_57 = arith.constant 8 : index
    %c0_58 = arith.constant 0 : index
    %c0_59 = arith.constant 0 : index
    %75 = vector.load %arg2[%c0_56, %c8_57, %c0_58, %c0_59] : memref<1x9x32x32xbf16, #tpu.memory_space<vmem>>, vector<1x1x32x32xbf16>
    %76 = vector.shape_cast %75 : vector<1x1x32x32xbf16> to vector<32x32xbf16>
    %77 = arith.truncf %74 : vector<32x512xf32> to vector<32x512xbf16>
    %cst_60 = arith.constant dense<0.000000e+00> : vector<32x512xf32>
    %78 = tpu.matmul %76, %77, %cst_60 {dimension_numbers = #tpu.dot_dimension_numbers<[1], [0], [0], [1], [0, 0, 1, 1], [], []>} : vector<32x32xbf16>, vector<32x512xbf16>, vector<32x512xf32> -> vector<32x512xf32>
    %79 = arith.addf %70, %78 : vector<32x512xf32>
    %c4_i32 = arith.constant 4 : i32
    %80 = arith.cmpi ne, %arg0, %c4_i32 : i32
    %81 = arith.extui %80 : i1 to i32
    %c0_i32_61 = arith.constant 0 : i32
    %82 = arith.cmpi ne, %81, %c0_i32_61 : i32
    scf.if %82 {
      %cst_64 = arith.constant dense<0.000000e+00> : vector<32xf32>
      %86 = vector.multi_reduction <add>, %79, %cst_64 [1] : vector<32x512xf32> to vector<32xf32>
      %87 = vector.shape_cast %86 : vector<32xf32> to vector<32x1xf32>
      %88 = arith.mulf %79, %79 : vector<32x512xf32>
      %cst_65 = arith.constant dense<0.000000e+00> : vector<32xf32>
      %89 = vector.multi_reduction <add>, %88, %cst_65 [1] : vector<32x512xf32> to vector<32xf32>
      %90 = vector.shape_cast %89 : vector<32xf32> to vector<32x1xf32>
      %cst_66 = arith.constant 0.001953125 : f32
      %91 = vector.broadcast %cst_66 : f32 to vector<32x1xf32>
      %92 = arith.mulf %87, %91 : vector<32x1xf32>
      %cst_67 = arith.constant 0.001953125 : f32
      %93 = vector.broadcast %cst_67 : f32 to vector<32x1xf32>
      %94 = arith.mulf %90, %93 : vector<32x1xf32>
      %95 = arith.mulf %92, %92 : vector<32x1xf32>
      %96 = arith.subf %94, %95 : vector<32x1xf32>
      %cst_68 = arith.constant 9.99999974E-6 : f32
      %97 = vector.broadcast %cst_68 : f32 to vector<32x1xf32>
      %98 = arith.addf %96, %97 : vector<32x1xf32>
      %99 = math.rsqrt %98 : vector<32x1xf32>
      %c0_69 = arith.constant 0 : index
      %c0_70 = arith.constant 0 : index
      %c0_71 = arith.constant 0 : index
      %100 = vector.load %arg3[%c0_69, %c0_70, %c0_71] : memref<1x32x1xf32, #tpu.memory_space<vmem>>, vector<1x32x1xf32>
      %101 = vector.shape_cast %100 : vector<1x32x1xf32> to vector<32x1xf32>
      %102 = arith.mulf %99, %101 : vector<32x1xf32>
      %c0_72 = arith.constant 0 : index
      %c0_73 = arith.constant 0 : index
      %c0_74 = arith.constant 0 : index
      %103 = vector.load %arg4[%c0_72, %c0_73, %c0_74] : memref<1x32x1xf32, #tpu.memory_space<vmem>>, vector<1x32x1xf32>
      %104 = vector.shape_cast %103 : vector<1x32x1xf32> to vector<32x1xf32>
      %105 = arith.mulf %92, %102 : vector<32x1xf32>
      %106 = arith.subf %104, %105 : vector<32x1xf32>
      %107 = vector.broadcast %102 : vector<32x1xf32> to vector<32x512xf32>
      %108 = arith.mulf %79, %107 : vector<32x512xf32>
      %109 = vector.broadcast %106 : vector<32x1xf32> to vector<32x512xf32>
      %110 = arith.addf %108, %109 : vector<32x512xf32>
      %cst_75 = arith.constant 0.000000e+00 : f32
      %111 = vector.broadcast %cst_75 : f32 to vector<32x512xf32>
      %112 = arith.maximumf %110, %111 : vector<32x512xf32>
      %c0_76 = arith.constant 0 : index
      %c128_77 = arith.constant 128 : index
      %113 = vector.load %arg7[%c0_76, %c128_77] : memref<32x768xf32, #tpu.memory_space<vmem>>, vector<32x512xf32>
      tpu.vector_store %arg7[%c0_76, %c128_77], %112 {strides = array<i32>} : memref<32x768xf32, #tpu.memory_space<vmem>>, vector<32x512xf32>,
    } else {
    }
    %c4_i32_62 = arith.constant 4 : i32
    %83 = arith.cmpi eq, %arg0, %c4_i32_62 : i32
    %84 = arith.extui %83 : i1 to i32
    %c0_i32_63 = arith.constant 0 : i32
    %85 = arith.cmpi ne, %84, %c0_i32_63 : i32
    scf.if %85 {
      %c0_64 = arith.constant 0 : index
      %c0_65 = arith.constant 0 : index
      %86 = vector.load %arg1[%c0_64, %c0_65] : memref<32x512xf32, #tpu.memory_space<vmem>>, vector<2x512xf32>
      %87 = vector.extract_strided_slice %79 {offsets = [0, 0], sizes = [2, 512], strides = [1, 1]} : vector<32x512xf32> to vector<2x512xf32>
      %88 = arith.addf %86, %87 : vector<2x512xf32>
      %c0_66 = arith.constant 0 : index
      %c0_67 = arith.constant 0 : index
      %89 = vector.load %arg6[%c0_66, %c0_67] : memref<2x512xf32, #tpu.memory_space<vmem>>, vector<2x512xf32>
      tpu.vector_store %arg6[%c0_66, %c0_67], %88 {strides = array<i32>} : memref<2x512xf32, #tpu.memory_space<vmem>>, vector<2x512xf32>,
    } else {
    }
    return
  }
  func.func @transform_0(%arg0: i32) -> (i32, i32) {
    %c0_i32 = arith.constant 0 : i32
    %c0_i32_0 = arith.constant 0 : i32
    %c0_i32_1 = arith.constant 0 : i32
    return %c0_i32, %c0_i32_0 : i32, i32
  }
  func.func @transform_1(%arg0: i32) -> (i32, i32, i32, i32) {
    %c0_i32 = arith.constant 0 : i32
    %c0_i32_0 = arith.constant 0 : i32
    %c0_i32_1 = arith.constant 0 : i32
    %c0_i32_2 = arith.constant 0 : i32
    return %arg0, %c0_i32, %c0_i32_0, %c0_i32_1 : i32, i32, i32, i32
  }
  func.func @transform_2(%arg0: i32) -> (i32, i32, i32) {
    %c0_i32 = arith.constant 0 : i32
    %c0_i32_0 = arith.constant 0 : i32
    %c0_i32_1 = arith.constant 0 : i32
    return %arg0, %c0_i32, %c0_i32_0 : i32, i32, i32
  }
  func.func @transform_3(%arg0: i32) -> (i32, i32, i32) {
    %c0_i32 = arith.constant 0 : i32
    %c0_i32_0 = arith.constant 0 : i32
    %c0_i32_1 = arith.constant 0 : i32
    return %arg0, %c0_i32, %c0_i32_0 : i32, i32, i32
  }
  func.func @transform_4(%arg0: i32) -> (i32, i32) {
    %c0_i32 = arith.constant 0 : i32
    %c0_i32_0 = arith.constant 0 : i32
    %c0_i32_1 = arith.constant 0 : i32
    return %c0_i32, %c0_i32_0 : i32, i32
  }
  func.func @transform_5(%arg0: i32) -> (i32, i32) {
    %c0_i32 = arith.constant 0 : i32
    %c0_i32_0 = arith.constant 0 : i32
    %c0_i32_1 = arith.constant 0 : i32
    return %c0_i32, %c0_i32_0 : i32, i32
  }
}

</mosaic_0001>

<llo_original>
// kernel: feature_network_cnn.1
$region0: #{feature_network_cnn.1}
  #allocation0 [shape = 'u32[]', space=smem, size = 0x4, offset = 0x4, fixed_abs, tag = 'smem constant byte address 0x4 - core index']
  #allocation1 [shape = 'u32[144,128]{1,0:T(1,128)}', space=vmem, size = 0x12000, scoped, tag = 'internal scratch']
  #allocation2 [shape = 'f32[32,768]{1,0:T(8,128)}', space=vmem, size = 0x18000, scoped, tag = 'scratch operand']
  %s0 = inlined_call_operand.vmem [shape: f32[32,512], index: 0, kind: input, shape index: {}]
  %s1 = inlined_call_operand.vmem [shape: bf16[5,9,32,32], index: 1, kind: input, shape index: {}]
  %s2 = inlined_call_operand.vmem [shape: f32[5,32,1], index: 2, kind: input, shape index: {}]
  %s3 = inlined_call_operand.vmem [shape: f32[5,32,1], index: 3, kind: input, shape index: {}]
  %s4 = inlined_call_operand.vmem [shape: f32[9,512], index: 4, kind: input, shape index: {}]
  %s5 = inlined_call_operand.vmem [shape: f32[2,512], index: 5, kind: output, shape index: {}]
  %s6 = sld [smem:[#allocation0]]
  $region65: #{feature_network_cnn.1} parent=0
    _
  %s8 = ssub.s32 1, %s6
  %s9 = scalar_select 0, %s8, %s6
  loop: start=0, step=1, limit=7
  $region2: #{feature_network_cnn.1} parent=0 // loop_pre_header
    _
  $region3: #{feature_network_cnn.1} parent=0 // loop_header
    %s11 = sphi 0, %s15
    %p12 = scmp.ge.s32.totalorder %s11, 7
    %s19 = sphi 0, %s19
    %s21 = sphi 0, %s19
    %s22 = sphi 0, %s21
    %s36 = sphi 0, %s22
    %s42 = sphi 0, %s44
    %s45 = sphi 0, %s42
    %s46 = sphi 0, %s45
    %s62 = sphi 0, %s46
    %s68 = sphi 0, %s70
    %s71 = sphi 0, %s68
    %s72 = sphi 0, %s71
    %s88 = sphi 0, %s72
    %s94 = sphi 0, %s96
    %s97 = sphi 0, %s94
    %s98 = sphi 0, %s97
    %s114 = sphi 0, %s98
    %s118 = sphi 0, %s118
    %s120 = sphi 0, %s118
    %s121 = sphi 0, %s120
    %s135 = sphi 0, %s121
    %s139 = sphi 0, %s139
    %s141 = sphi 0, %s139
    %s142 = sphi 0, %s141
    %s156 = sphi 0, %s142
  $region4: #{feature_network_cnn.1} parent=0 // loop_header_branch
    %14 = sbr.rel (%p12) target = $region8
  $region5: #{feature_network_cnn.1} parent=0 // loop_body
    %s16 = ssub.s32 %s11, 1
    %s17 = ssub.s32 %s11, 2
    %s18 = sadd.s32 %s11, 1
    %s20 = sadd.s32 %s19, 1
    %p23 = scmp.eq.s32.totalorder %s11, 4
    %p24 = scmp.ne.s32.totalorder %s19, %s21
    %p25 = scmp.eq.s32.totalorder %s11, 0
    %p26 = por %p24, %p25
    %p27 = scmp.ne.s32.totalorder %s19, %s21
    %p28 = scmp.eq.s32.totalorder %s16, 4
    %p29 = por %p27, %p28
    %p30 = scmp.ne.s32.totalorder %s21, %s22
    %p31 = scmp.eq.s32.totalorder %s16, 0
    %p32 = por %p30, %p31
    %p33 = scmp.ne.s32.totalorder %s21, %s22
    %p34 = scmp.eq.s32.totalorder %s17, 4
    %p35 = por %p33, %p34
    %p37 = scmp.ne.s32.totalorder %s22, %s36
    %p38 = scmp.eq.s32.totalorder %s17, 0
    %p39 = por %p37, %p38
    %s40 = ssub.s32 %s11, %s18
    %p41 = scmp.eq.s32.totalorder %s40, 0
    %s43 = sadd.s32 %s42, 1
    %s44 = scalar_select %p41, %s42, %s43
    %p47 = pneg %p41
    %p48 = scmp.eq.s32.totalorder %s11, 4
    %p49 = por %p47, %p48
    %p50 = scmp.ne.s32.totalorder %s42, %s45
    %p51 = scmp.eq.s32.totalorder %s11, 0
    %p52 = por %p50, %p51
    %p53 = scmp.ne.s32.totalorder %s42, %s45
    %p54 = scmp.eq.s32.totalorder %s16, 4
    %p55 = por %p53, %p54
    %p56 = scmp.ne.s32.totalorder %s45, %s46
    %p57 = scmp.eq.s32.totalorder %s16, 0
    %p58 = por %p56, %p57
    %p59 = scmp.ne.s32.totalorder %s45, %s46
    %p60 = scmp.eq.s32.totalorder %s17, 4
    %p61 = por %p59, %p60
    %p63 = scmp.ne.s32.totalorder %s46, %s62
    %p64 = scmp.eq.s32.totalorder %s17, 0
    %p65 = por %p63, %p64
    %s66 = ssub.s32 %s11, %s18
    %p67 = scmp.eq.s32.totalorder %s66, 0
    %s69 = sadd.s32 %s68, 1
    %s70 = scalar_select %p67, %s68, %s69
    %p73 = pneg %p67
    %p74 = scmp.eq.s32.totalorder %s11, 4
    %p75 = por %p73, %p74
    %p76 = scmp.ne.s32.totalorder %s68, %s71
    %p77 = scmp.eq.s32.totalorder %s11, 0
    %p78 = por %p76, %p77
    %p79 = scmp.ne.s32.totalorder %s68, %s71
    %p80 = scmp.eq.s32.totalorder %s16, 4
    %p81 = por %p79, %p80
    %p82 = scmp.ne.s32.totalorder %s71, %s72
    %p83 = scmp.eq.s32.totalorder %s16, 0
    %p84 = por %p82, %p83
    %p85 = scmp.ne.s32.totalorder %s71, %s72
    %p86 = scmp.eq.s32.totalorder %s17, 4
    %p87 = por %p85, %p86
    %p89 = scmp.ne.s32.totalorder %s72, %s88
    %p90 = scmp.eq.s32.totalorder %s17, 0
    %p91 = por %p89, %p90
    %s92 = ssub.s32 %s11, %s18
    %p93 = scmp.eq.s32.totalorder %s92, 0
    %s95 = sadd.s32 %s94, 1
    %s96 = scalar_select %p93, %s94, %s95
    %p99 = pneg %p93
    %p100 = scmp.eq.s32.totalorder %s11, 4
    %p101 = por %p99, %p100
    %p102 = scmp.ne.s32.totalorder %s94, %s97
    %p103 = scmp.eq.s32.totalorder %s11, 0
    %p104 = por %p102, %p103
    %p105 = scmp.ne.s32.totalorder %s94, %s97
    %p106 = scmp.eq.s32.totalorder %s16, 4
    %p107 = por %p105, %p106
    %p108 = scmp.ne.s32.totalorder %s97, %s98
    %p109 = scmp.eq.s32.totalorder %s16, 0
    %p110 = por %p108, %p109
    %p111 = scmp.ne.s32.totalorder %s97, %s98
    %p112 = scmp.eq.s32.totalorder %s17, 4
    %p113 = por %p111, %p112
    %p115 = scmp.ne.s32.totalorder %s98, %s114
    %p116 = scmp.eq.s32.totalorder %s17, 0
    %p117 = por %p115, %p116
    %s119 = sadd.s32 %s118, 1
    %p122 = scmp.eq.s32.totalorder %s11, 4
    %p123 = scmp.ne.s32.totalorder %s118, %s120
    %p124 = scmp.eq.s32.totalorder %s11, 0
    %p125 = por %p123, %p124
    %p126 = scmp.ne.s32.totalorder %s118, %s120
    %p127 = scmp.eq.s32.totalorder %s16, 4
    %p128 = por %p126, %p127
    %p129 = scmp.ne.s32.totalorder %s120, %s121
    %p130 = scmp.eq.s32.totalorder %s16, 0
    %p131 = por %p129, %p130
    %p132 = scmp.ne.s32.totalorder %s120, %s121
    %p133 = scmp.eq.s32.totalorder %s17, 4
    %p134 = por %p132, %p133
    %p136 = scmp.ne.s32.totalorder %s121, %s135
    %p137 = scmp.eq.s32.totalorder %s17, 0
    %p138 = por %p136, %p137
    %s140 = sadd.s32 %s139, 1
    %p143 = scmp.eq.s32.totalorder %s11, 4
    %p144 = scmp.ne.s32.totalorder %s139, %s141
    %p145 = scmp.eq.s32.totalorder %s11, 0
    %p146 = por %p144, %p145
    %p147 = scmp.ne.s32.totalorder %s139, %s141
    %p148 = scmp.eq.s32.totalorder %s16, 4
    %p149 = por %p147, %p148
    %p150 = scmp.ne.s32.totalorder %s141, %s142
    %p151 = scmp.eq.s32.totalorder %s16, 0
    %p152 = por %p150, %p151
    %p153 = scmp.ne.s32.totalorder %s141, %s142
    %p154 = scmp.eq.s32.totalorder %s17, 4
    %p155 = por %p153, %p154
    %p157 = scmp.ne.s32.totalorder %s142, %s156
    %p158 = scmp.eq.s32.totalorder %s17, 0
    %p159 = por %p157, %p158
    %p160 = scmp.le.s32.totalorder 1, %s11
    %p161 = scmp.lt.s32.totalorder %s11, 6
    %p162 = pnand %p160, %p161
    %p163 = pneg %p162
    // Predicated region
    $region9: #{feature_network_cnn.1} parent=5 // pred_check
      _
    $region10: #{feature_network_cnn.1} parent=5 // pred_check_branch
      %165 = sbr.rel (%p162) target = $region12
    $region11: #{feature_network_cnn.1} parent=5 // pred_region
      %s166 = ssub.s32 %s11, 1
      // Predicated region
      $region13: #{feature_network_cnn.1} parent=11 // pred_check
        %p167 = pneg %p32
      $region14: #{feature_network_cnn.1} parent=11 // pred_check_branch
        %169 = sbr.rel (%p167) target = $region16
      $region15: #{feature_network_cnn.1} parent=11 // pred_region
        _
      $region16: #{feature_network_cnn.1} parent=11 // pred_fallthru
        _
      // Predicated region
      $region17: #{feature_network_cnn.1} parent=11 // pred_check
        %p170 = pneg %p131
      $region18: #{feature_network_cnn.1} parent=11 // pred_check_branch
        %172 = sbr.rel (%p170) target = $region20
      $region19: #{feature_network_cnn.1} parent=11 // pred_region
        _
      $region20: #{feature_network_cnn.1} parent=11 // pred_fallthru
        _
    $region12: #{feature_network_cnn.1} parent=5 // pred_fallthru
      _
    %p173 = scmp.lt.s32.totalorder %s11, 5
    // Predicated region
    $region21: #{feature_network_cnn.1} parent=5 // pred_check
      %p174 = pneg %p173
    $region22: #{feature_network_cnn.1} parent=5 // pred_check_branch
      %176 = sbr.rel (%p174) target = $region24
    $region23: #{feature_network_cnn.1} parent=5 // pred_region
      // Predicated region
      $region25: #{feature_network_cnn.1} parent=23 // pred_check
        %p177 = pneg %p52
      $region26: #{feature_network_cnn.1} parent=23 // pred_check_branch
        %179 = sbr.rel (%p177) target = $region28
      $region27: #{feature_network_cnn.1} parent=23 // pred_region
        %p180 = scmp.lt.s32.totalorder %s11, 4
        %s181 = scalar_select %p180, %s11, 4
        %s182 = smul.addr %s181, 36
        %s183 = smul.addr %s182, 4
        %s184 = scalar_lea.vmem %s1, %s183
      $region28: #{feature_network_cnn.1} parent=23 // pred_fallthru
        _
      // Predicated region
      $region29: #{feature_network_cnn.1} parent=23 // pred_check
        %p185 = pneg %p78
      $region30: #{feature_network_cnn.1} parent=23 // pred_check_branch
        %187 = sbr.rel (%p185) target = $region32
      $region31: #{feature_network_cnn.1} parent=23 // pred_region
        %p188 = scmp.lt.s32.totalorder %s11, 4
        %s189 = scalar_select %p188, %s11, 4
        %s190 = smul.addr %s189, 4
        %s191 = smul.addr %s190, 8
        %s192 = scalar_lea.vmem %s2, %s191
      $region32: #{feature_network_cnn.1} parent=23 // pred_fallthru
        _
      // Predicated region
      $region33: #{feature_network_cnn.1} parent=23 // pred_check
        %p193 = pneg %p104
      $region34: #{feature_network_cnn.1} parent=23 // pred_check_branch
        %195 = sbr.rel (%p193) target = $region36
      $region35: #{feature_network_cnn.1} parent=23 // pred_region
        %p196 = scmp.lt.s32.totalorder %s11, 4
        %s197 = scalar_select %p196, %s11, 4
        %s198 = smul.addr %s197, 4
        %s199 = smul.addr %s198, 8
        %s200 = scalar_lea.vmem %s3, %s199
      $region36: #{feature_network_cnn.1} parent=23 // pred_fallthru
        _
    $region24: #{feature_network_cnn.1} parent=5 // pred_fallthru
      _
    %p201 = scmp.le.s32.totalorder 1, %s11
    %p202 = scmp.lt.s32.totalorder %s11, 6
    %p203 = pnand %p201, %p202
    %p204 = pneg %p203
    // Predicated region
    $region37: #{feature_network_cnn.1} parent=5 // pred_check
      _
    $region38: #{feature_network_cnn.1} parent=5 // pred_check_branch
      %206 = sbr.rel (%p203) target = $region40
    $region39: #{feature_network_cnn.1} parent=5 // pred_region
      %s207 = ssub.s32 %s11, 1
      %p208 = pneg %p32
      %p209 = pneg %p29
      %p210 = scmp.lt.s32.totalorder %s16, 4
      %s211 = scalar_select %p210, %s16, 4
      %s212 = smul.addr %s211, 36
      %s213 = smul.addr %s212, 4
      %s214 = scalar_lea.vmem %s1, %s213
      %p215 = pneg %p58
      %p216 = pneg %p55
      %p217 = scmp.lt.s32.totalorder %s16, 4
      %s218 = scalar_select %p217, %s16, 4
      %s219 = smul.addr %s218, 4
      %s220 = smul.addr %s219, 8
      %s221 = scalar_lea.vmem %s2, %s220
      %p222 = pneg %p84
      %p223 = pneg %p81
      %p224 = scmp.lt.s32.totalorder %s16, 4
      %s225 = scalar_select %p224, %s16, 4
      %s226 = smul.addr %s225, 4
      %s227 = smul.addr %s226, 8
      %s228 = scalar_lea.vmem %s3, %s227
      %p229 = pneg %p110
      %p230 = pneg %p107
      %p231 = pneg %p131
      %p232 = pneg %p128
      %p233 = pneg %p152
      %p234 = pneg %p149
      %p235 = scmp.lt.s32.totalorder %s16, 4
      %s236 = scalar_select %p235, %s16, 4
      %s237 = smul.addr %s236, 36
      %s238 = smul.addr %s237, 4
      %s239 = scalar_lea.vmem %s1, %s238
      %p240 = scmp.lt.s32.totalorder %s16, 4
      %s241 = scalar_select %p240, %s16, 4
      %s242 = smul.addr %s241, 4
      %s243 = smul.addr %s242, 8
      %s244 = scalar_lea.vmem %s2, %s243
      %p245 = scmp.lt.s32.totalorder %s16, 4
      %s246 = scalar_select %p245, %s16, 4
      %s247 = smul.addr %s246, 4
      %s248 = smul.addr %s247, 8
      %s249 = scalar_lea.vmem %s3, %s248
      %p251 = scmp.eq.s32.totalorder %s16, 0
      // Predicated region
      $region41: #{feature_network_cnn.1} parent=39 // pred_check
        %p252 = pneg %p251
      $region42: #{feature_network_cnn.1} parent=39 // pred_check_branch
        %254 = sbr.rel (%p252) target = $region44
      $region43: #{feature_network_cnn.1} parent=39 // pred_region
        %255 = vst [vmem:[#allocation2] sm:$0xff] 0.0
        %256 = vst [vmem:[#allocation2 + $0x30] sm:$0xff] 0.0
        %257 = vst [vmem:[#allocation2 + $0x60] sm:$0xff] 0.0
        %258 = vst [vmem:[#allocation2 + $0x90] sm:$0xff] 0.0
        %259 = vst [vmem:[#allocation2 + $0x28] sm:$0xff] 0.0
        %260 = vst [vmem:[#allocation2 + $0x58] sm:$0xff] 0.0
        %261 = vst [vmem:[#allocation2 + $0x88] sm:$0xff] 0.0
        %262 = vst [vmem:[#allocation2 + $0xb8] sm:$0xff] 0.0
        %v263 = vld [vmem:[%s0] sm:$0xff]
        %v264 = vld [vmem:[%s0 + $0x8] sm:$0xff]
        %v265 = vld [vmem:[%s0 + $0x10] sm:$0xff]
        %v266 = vld [vmem:[%s0 + $0x18] sm:$0xff]
        %v267 = vld [vmem:[%s0 + $0x20] sm:$0xff]
        %v268 = vld [vmem:[%s0 + $0x28] sm:$0xff]
        %v269 = vld [vmem:[%s0 + $0x30] sm:$0xff]
        %v270 = vld [vmem:[%s0 + $0x38] sm:$0xff]
        %v271 = vld [vmem:[%s0 + $0x40] sm:$0xff]
        %v272 = vld [vmem:[%s0 + $0x48] sm:$0xff]
        %v273 = vld [vmem:[%s0 + $0x50] sm:$0xff]
        %v274 = vld [vmem:[%s0 + $0x58] sm:$0xff]
        %v275 = vld [vmem:[%s0 + $0x60] sm:$0xff]
        %v276 = vld [vmem:[%s0 + $0x68] sm:$0xff]
        %v277 = vld [vmem:[%s0 + $0x70] sm:$0xff]
        %v278 = vld [vmem:[%s0 + $0x78] sm:$0xff]
        %279 = vst [vmem:[#allocation2 + $0x8] sm:$0xff] %v263
        %280 = vst [vmem:[#allocation2 + $0x10] sm:$0xff] %v264
        %281 = vst [vmem:[#allocation2 + $0x18] sm:$0xff] %v265
        %282 = vst [vmem:[#allocation2 + $0x20] sm:$0xff] %v266
        %283 = vst [vmem:[#allocation2 + $0x38] sm:$0xff] %v267
        %284 = vst [vmem:[#allocation2 + $0x40] sm:$0xff] %v268
        %285 = vst [vmem:[#allocation2 + $0x48] sm:$0xff] %v269
        %286 = vst [vmem:[#allocation2 + $0x50] sm:$0xff] %v270
        %287 = vst [vmem:[#allocation2 + $0x68] sm:$0xff] %v271
        %288 = vst [vmem:[#allocation2 + $0x70] sm:$0xff] %v272
        %289 = vst [vmem:[#allocation2 + $0x78] sm:$0xff] %v273
        %290 = vst [vmem:[#allocation2 + $0x80] sm:$0xff] %v274
        %291 = vst [vmem:[#allocation2 + $0x98] sm:$0xff] %v275
        %292 = vst [vmem:[#allocation2 + $0xa0] sm:$0xff] %v276
        %293 = vst [vmem:[#allocation2 + $0xa8] sm:$0xff] %v277
        %294 = vst [vmem:[#allocation2 + $0xb0] sm:$0xff] %v278
      $region44: #{feature_network_cnn.1} parent=39 // pred_fallthru
        _
      %v295 = vld [vmem:[#allocation2] sm:$0xff]
      %v296 = vld [vmem:[#allocation2 + $0x8] sm:$0xff]
      %v297 = vld [vmem:[#allocation2 + $0x10] sm:$0xff]
      %v298 = vld [vmem:[#allocation2 + $0x18] sm:$0xff]
      %v299 = vld [vmem:[#allocation2 + $0x20] sm:$0xff]
      %v300 = vld [vmem:[#allocation2 + $0x30] sm:$0xff]
      %v301 = vld [vmem:[#allocation2 + $0x38] sm:$0xff]
      %v302 = vld [vmem:[#allocation2 + $0x40] sm:$0xff]
      %v303 = vld [vmem:[#allocation2 + $0x48] sm:$0xff]
      %v304 = vld [vmem:[#allocation2 + $0x50] sm:$0xff]
      %v305 = vld [vmem:[#allocation2 + $0x60] sm:$0xff]
      %v306 = vld [vmem:[#allocation2 + $0x68] sm:$0xff]
      %v307 = vld [vmem:[#allocation2 + $0x70] sm:$0xff]
      %v308 = vld [vmem:[#allocation2 + $0x78] sm:$0xff]
      %v309 = vld [vmem:[#allocation2 + $0x80] sm:$0xff]
      %v310 = vld [vmem:[#allocation2 + $0x90] sm:$0xff]
      %v311 = vld [vmem:[#allocation2 + $0x98] sm:$0xff]
      %v312 = vld [vmem:[#allocation2 + $0xa0] sm:$0xff]
      %v313 = vld [vmem:[#allocation2 + $0xa8] sm:$0xff]
      %v314 = vld [vmem:[#allocation2 + $0xb0] sm:$0xff]
      %v315 = vld [vmem:[%s4] ss:$8 sm:$0xf]
      %v317 = vlaneseq
      %v318 = vshrl.u32 %v317, 7
      %v319 = vsub.s32 0, %v318
      %v320 = vrot.slane %v315, %v319
      %v321 = vlaneseq
      %v322 = vshrl.u32 %v321, 7
      %v323 = vsub.s32 1, %v322
      %v324 = vrot.slane %v315, %v323
      %v325 = vlaneseq
      %v326 = vshrl.u32 %v325, 7
      %v327 = vsub.s32 2, %v326
      %v328 = vrot.slane %v315, %v327
      %v329 = vlaneseq
      %v330 = vshrl.u32 %v329, 7
      %v331 = vsub.s32 3, %v330
      %v332 = vrot.slane %v315, %v331
      %333 = vrot.lane.b32.xlu0 %v320, 111
      %v334 = vpop.permute.xlu0 %333
      %335 = vrot.lane.b32.xlu0 %v324, 111
      %v336 = vpop.permute.xlu0 %335
      %337 = vrot.lane.b32.xlu0 %v328, 111
      %v338 = vpop.permute.xlu0 %337
      %339 = vrot.lane.b32.xlu0 %v332, 111
      %v340 = vpop.permute.xlu0 %339
      %vm341 = vcmask 908288
      %v342 = vsel %vm341, %v334, %v336
      %v343 = vsel %vm341, %v336, %v338
      %v344 = vsel %vm341, %v338, %v340
      %v350 = vmul.f32 %v295, %v334
      %v351 = vmul.f32 %v296, %v342
      %v352 = vmul.f32 %v297, %v343
      %v353 = vmul.f32 %v298, %v344
      %v354 = vmul.f32 %v299, %v340
      %v355 = vmul.f32 %v300, %v334
      %v356 = vmul.f32 %v301, %v342
      %v357 = vmul.f32 %v302, %v343
      %v358 = vmul.f32 %v303, %v344
      %v359 = vmul.f32 %v304, %v340
      %v360 = vmul.f32 %v305, %v334
      %v361 = vmul.f32 %v306, %v342
      %v362 = vmul.f32 %v307, %v343
      %v363 = vmul.f32 %v308, %v344
      %v364 = vmul.f32 %v309, %v340
      %v365 = vmul.f32 %v310, %v334
      %v366 = vmul.f32 %v311, %v342
      %v367 = vmul.f32 %v312, %v343
      %v368 = vmul.f32 %v313, %v344
      %v369 = vmul.f32 %v314, %v340
      %v370 = vld [vmem:[%s239] sm:$0xf]
      %v371 = vld [vmem:[%s239 + $0x4] sm:$0xf]
      %v372 = vld [vmem:[%s239 + $0x8] sm:$0xf]
      %v373 = vld [vmem:[%s239 + $0xc] sm:$0xf]
      %v374 = vpack.c.bf16 %v355, %v350
      %v375 = vpack.c.bf16 %v356, %v351
      %v376 = vpack.c.bf16 %v357, %v352
      %v377 = vpack.c.bf16 %v358, %v353
      %v378 = vpack.c.bf16 %v359, %v354
      %v379 = vpack.c.bf16 %v365, %v360
      %v380 = vpack.c.bf16 %v366, %v361
      %v381 = vpack.c.bf16 %v367, %v362
      %v382 = vpack.c.bf16 %v368, %v363
      %v383 = vpack.c.bf16 %v369, %v364
      %s384 = scalar_lea.vmem %s4, 1
      %v385 = vld [vmem:[%s384] ss:$8 sm:$0xf]
      %v387 = vlaneseq
      %v388 = vshrl.u32 %v387, 7
      %v389 = vsub.s32 0, %v388
      %v390 = vrot.slane %v385, %v389
      %v391 = vlaneseq
      %v392 = vshrl.u32 %v391, 7
      %v393 = vsub.s32 1, %v392
      %v394 = vrot.slane %v385, %v393
      %v395 = vlaneseq
      %v396 = vshrl.u32 %v395, 7
      %v397 = vsub.s32 2, %v396
      %v398 = vrot.slane %v385, %v397
      %v399 = vlaneseq
      %v400 = vshrl.u32 %v399, 7
      %v401 = vsub.s32 3, %v400
      %v402 = vrot.slane %v385, %v401
      %403 = vrot.lane.b32.xlu0 %v390, 112
      %v404 = vpop.permute.xlu0 %403
      %405 = vrot.lane.b32.xlu0 %v394, 112
      %v406 = vpop.permute.xlu0 %405
      %407 = vrot.lane.b32.xlu0 %v398, 112
      %v408 = vpop.permute.xlu0 %407
      %409 = vrot.lane.b32.xlu0 %v402, 112
      %v410 = vpop.permute.xlu0 %409
      %vm411 = vcmask 916480
      %v412 = vsel %vm411, %v404, %v406
      %v413 = vsel %vm411, %v406, %v408
      %v414 = vsel %vm411, %v408, %v410
      %v420 = vmul.f32 %v295, %v404
      %v421 = vmul.f32 %v296, %v412
      %v422 = vmul.f32 %v297, %v413
      %v423 = vmul.f32 %v298, %v414
      %v424 = vmul.f32 %v299, %v410
      %v425 = vmul.f32 %v300, %v404
      %v426 = vmul.f32 %v301, %v412
      %v427 = vmul.f32 %v302, %v413
      %v428 = vmul.f32 %v303, %v414
      %v429 = vmul.f32 %v304, %v410
      %v430 = vmul.f32 %v305, %v404
      %v431 = vmul.f32 %v306, %v412
      %v432 = vmul.f32 %v307, %v413
      %v433 = vmul.f32 %v308, %v414
      %v434 = vmul.f32 %v309, %v410
      %v435 = vmul.f32 %v310, %v404
      %v436 = vmul.f32 %v311, %v412
      %v437 = vmul.f32 %v312, %v413
      %v438 = vmul.f32 %v313, %v414
      %v439 = vmul.f32 %v314, %v410
      %s440 = scalar_lea.vmem %s239, 16
      %v441 = vld [vmem:[%s440] sm:$0xf]
      %v442 = vld [vmem:[%s440 + $0x4] sm:$0xf]
      %v443 = vld [vmem:[%s440 + $0x8] sm:$0xf]
      %v444 = vld [vmem:[%s440 + $0xc] sm:$0xf]
      %v445 = vpack.c.bf16 %v425, %v420
      %v446 = vpack.c.bf16 %v426, %v421
      %v447 = vpack.c.bf16 %v427, %v422
      %v448 = vpack.c.bf16 %v428, %v423
      %v449 = vpack.c.bf16 %v429, %v424
      %v450 = vpack.c.bf16 %v435, %v430
      %v451 = vpack.c.bf16 %v436, %v431
      %v452 = vpack.c.bf16 %v437, %v432
      %v453 = vpack.c.bf16 %v438, %v433
      %v454 = vpack.c.bf16 %v439, %v434
      %v459 = vunpack.c.l.b16 %v441
      %v460 = vunpack.c.l.b16 %v442
      %v461 = vunpack.c.l.b16 %v443
      %v462 = vunpack.c.l.b16 %v444
      %v463 = vpack.c.b16 %v460, %v459
      %v464 = vpack.c.b16 %v462, %v461
      %475 = vrot.lane.b32.xlu0 %v445, 16
      %v476 = vpop.permute.xlu0 %475
      %477 = vrot.lane.b32.xlu0 %v446, 16
      %v478 = vpop.permute.xlu0 %477
      %479 = vrot.lane.b32.xlu0 %v447, 16
      %v480 = vpop.permute.xlu0 %479
      %481 = vrot.lane.b32.xlu0 %v448, 16
      %v482 = vpop.permute.xlu0 %481
      %483 = vrot.lane.b32.xlu0 %v449, 16
      %v484 = vpop.permute.xlu0 %483
      %485 = vrot.lane.b32.xlu0 %v450, 16
      %v486 = vpop.permute.xlu0 %485
      %487 = vrot.lane.b32.xlu0 %v451, 16
      %v488 = vpop.permute.xlu0 %487
      %489 = vrot.lane.b32.xlu0 %v452, 16
      %v490 = vpop.permute.xlu0 %489
      %491 = vrot.lane.b32.xlu0 %v453, 16
      %v492 = vpop.permute.xlu0 %491
      %493 = vrot.lane.b32.xlu0 %v454, 16
      %v494 = vpop.permute.xlu0 %493
      %vm495 = vcmask 130048
      %v496 = vsel %vm495, %v476, %v478
      %v497 = vsel %vm495, %v478, %v480
      %v498 = vsel %vm495, %v480, %v482
      %v499 = vsel %vm495, %v482, %v484
      %v500 = vsel %vm495, %v486, %v488
      %v501 = vsel %vm495, %v488, %v490
      %v502 = vsel %vm495, %v490, %v492
      %v503 = vsel %vm495, %v492, %v494
      %vm512 = vcmask 261120
      %v514 = vsel %vm512, %v463, 0
      %v517 = vsel %vm512, %v464, 0
      %519 = vmatprep.subr.bf16.mxu0 0
      %520 = vmatpush1.bf16.msra.mxu0 0
      %521 = vmatprep.subr.bf16.mxu0 0
      %522 = vmatpush1.bf16.msra.mxu0 0
      %523 = vmatprep.subr.bf16.mxu0 0
      %524 = vmatpush1.bf16.msra.mxu0 0
      %525 = vmatprep.subr.bf16.mxu0 0
      %526 = vmatpush1.bf16.msra.mxu0 0
      %527 = vmatprep.subr.bf16.mxu0 0
      %528 = vmatpush1.bf16.msra.mxu0 0
      %529 = vmatprep.subr.bf16.mxu0 0
      %530 = vmatpush1.bf16.msra.mxu0 0
      %531 = vmatprep.subr.bf16.mxu0 %v501
      %532 = vmatpush1.bf16.msra.mxu0 %v500
      %533 = vmatprep.subr.bf16.mxu0 %v497
      %534 = vmatpush1.bf16.msra.mxu0 %v496
      %535 = vmatprep.subr.bf16.mxu0 0
      %536 = vmatpush2.bf16.msra.mxu0 0
      %537 = vmatprep.subr.bf16.mxu0 0
      %538 = vmatpush2.bf16.msra.mxu0 0
      %539 = vmatprep.subr.bf16.mxu0 0
      %540 = vmatpush2.bf16.msra.mxu0 0
      %541 = vmatprep.subr.bf16.mxu0 0
      %542 = vmatpush2.bf16.msra.mxu0 0
      %543 = vmatprep.subr.bf16.mxu0 0
      %544 = vmatpush2.bf16.msra.mxu0 0
      %545 = vmatprep.subr.bf16.mxu0 0
      %546 = vmatpush2.bf16.msra.mxu0 0
      %547 = vmatprep.subr.bf16.mxu0 0
      %548 = vmatpush2.bf16.msra.mxu0 0
      %549 = vmatprep.subr.bf16.mxu0 0
      %550 = vmatpush2.bf16.msra.mxu0 0
      %551 = vmatprep.mubr.bf16.mxu0 0
      %552 = vmatmul.mubr.bf16.gmra.mxu0 %v514
      %v553 = vpop.f32.mrf.mxu0
      %v554 = vadd.f32 0.0, %v553
      %v555 = vpop.f32.mrf.mxu0
      %v556 = vadd.f32 0.0, %v555
      %v557 = vpop.f32.mrf.mxu0
      %v558 = vadd.f32 0.0, %v557
      %v559 = vpop.f32.mrf.mxu0
      %v560 = vadd.f32 0.0, %v559
      %561 = vmatprep.mubr.bf16.mxu0 0
      %562 = vmatmul.mubr.bf16.gmra.mxu0 %v517
      %v563 = vpop.f32.mrf.mxu0
      %v564 = vadd.f32 0.0, %v563
      %v565 = vpop.f32.mrf.mxu0
      %v566 = vadd.f32 0.0, %v565
      %v567 = vpop.f32.mrf.mxu0
      %v568 = vadd.f32 0.0, %v567
      %v569 = vpop.f32.mrf.mxu0
      %v570 = vadd.f32 0.0, %v569
      %571 = vdwg.mxu0
      %572 = vmatprep.subr.bf16.mxu0 0
      %573 = vmatpush1.bf16.msra.mxu0 0
      %574 = vmatprep.subr.bf16.mxu0 0
      %575 = vmatpush1.bf16.msra.mxu0 0
      %576 = vmatprep.subr.bf16.mxu0 0
      %577 = vmatpush1.bf16.msra.mxu0 0
      %578 = vmatprep.subr.bf16.mxu0 0
      %579 = vmatpush1.bf16.msra.mxu0 0
      %580 = vmatprep.subr.bf16.mxu0 0
      %581 = vmatpush1.bf16.msra.mxu0 0
      %582 = vmatprep.subr.bf16.mxu0 0
      %583 = vmatpush1.bf16.msra.mxu0 0
      %584 = vmatprep.subr.bf16.mxu0 %v503
      %585 = vmatpush1.bf16.msra.mxu0 %v502
      %586 = vmatprep.subr.bf16.mxu0 %v499
      %587 = vmatpush1.bf16.msra.mxu0 %v498
      %588 = vmatprep.subr.bf16.mxu0 0
      %589 = vmatpush2.bf16.msra.mxu0 0
      %590 = vmatprep.subr.bf16.mxu0 0
      %591 = vmatpush2.bf16.msra.mxu0 0
      %592 = vmatprep.subr.bf16.mxu0 0
      %593 = vmatpush2.bf16.msra.mxu0 0
      %594 = vmatprep.subr.bf16.mxu0 0
      %595 = vmatpush2.bf16.msra.mxu0 0
      %596 = vmatprep.subr.bf16.mxu0 0
      %597 = vmatpush2.bf16.msra.mxu0 0
      %598 = vmatprep.subr.bf16.mxu0 0
      %599 = vmatpush2.bf16.msra.mxu0 0
      %600 = vmatprep.subr.bf16.mxu0 0
      %601 = vmatpush2.bf16.msra.mxu0 0
      %602 = vmatprep.subr.bf16.mxu0 0
      %603 = vmatpush2.bf16.msra.mxu0 0
      %604 = vmatprep.mubr.bf16.mxu0 0
      %605 = vmatmul.mubr.bf16.gmra.mxu0 %v514
      %v606 = vpop.f32.mrf.mxu0
      %v607 = vadd.f32 0.0, %v606
      %v608 = vpop.f32.mrf.mxu0
      %v609 = vadd.f32 0.0, %v608
      %v610 = vpop.f32.mrf.mxu0
      %v611 = vadd.f32 0.0, %v610
      %v612 = vpop.f32.mrf.mxu0
      %v613 = vadd.f32 0.0, %v612
      %614 = vmatprep.mubr.bf16.mxu0 0
      %615 = vmatmul.mubr.bf16.gmra.mxu0 %v517
      %v616 = vpop.f32.mrf.mxu0
      %v617 = vadd.f32 0.0, %v616
      %v618 = vpop.f32.mrf.mxu0
      %v619 = vadd.f32 0.0, %v618
      %v620 = vpop.f32.mrf.mxu0
      %v621 = vadd.f32 0.0, %v620
      %v622 = vpop.f32.mrf.mxu0
      %v623 = vadd.f32 0.0, %v622
      %624 = vdwg.mxu0
      %v629 = vunpack.c.l.b16 %v370
      %v630 = vunpack.c.l.b16 %v371
      %v631 = vunpack.c.l.b16 %v372
      %v632 = vunpack.c.l.b16 %v373
      %v633 = vpack.c.b16 %v630, %v629
      %v634 = vpack.c.b16 %v632, %v631
      %645 = vrot.lane.b32.xlu0 %v374, 17
      %v646 = vpop.permute.xlu0 %645
      %647 = vrot.lane.b32.xlu0 %v375, 17
      %v648 = vpop.permute.xlu0 %647
      %649 = vrot.lane.b32.xlu0 %v376, 17
      %v650 = vpop.permute.xlu0 %649
      %651 = vrot.lane.b32.xlu0 %v377, 17
      %v652 = vpop.permute.xlu0 %651
      %653 = vrot.lane.b32.xlu0 %v378, 17
      %v654 = vpop.permute.xlu0 %653
      %655 = vrot.lane.b32.xlu0 %v379, 17
      %v656 = vpop.permute.xlu0 %655
      %657 = vrot.lane.b32.xlu0 %v380, 17
      %v658 = vpop.permute.xlu0 %657
      %659 = vrot.lane.b32.xlu0 %v381, 17
      %v660 = vpop.permute.xlu0 %659
      %661 = vrot.lane.b32.xlu0 %v382, 17
      %v662 = vpop.permute.xlu0 %661
      %663 = vrot.lane.b32.xlu0 %v383, 17
      %v664 = vpop.permute.xlu0 %663
      %vm665 = vcmask 138240
      %v666 = vsel %vm665, %v646, %v648
      %v667 = vsel %vm665, %v648, %v650
      %v668 = vsel %vm665, %v650, %v652
      %v669 = vsel %vm665, %v652, %v654
      %v670 = vsel %vm665, %v656, %v658
      %v671 = vsel %vm665, %v658, %v660
      %v672 = vsel %vm665, %v660, %v662
      %v673 = vsel %vm665, %v662, %v664
      %v683 = vsel %vm512, %v633, 0
      %v686 = vsel %vm512, %v634, 0
      %688 = vmatprep.subr.bf16.mxu0 0
      %689 = vmatpush1.bf16.msra.mxu0 0
      %690 = vmatprep.subr.bf16.mxu0 0
      %691 = vmatpush1.bf16.msra.mxu0 0
      %692 = vmatprep.subr.bf16.mxu0 0
      %693 = vmatpush1.bf16.msra.mxu0 0
      %694 = vmatprep.subr.bf16.mxu0 0
      %695 = vmatpush1.bf16.msra.mxu0 0
      %696 = vmatprep.subr.bf16.mxu0 0
      %697 = vmatpush1.bf16.msra.mxu0 0
      %698 = vmatprep.subr.bf16.mxu0 0
      %699 = vmatpush1.bf16.msra.mxu0 0
      %700 = vmatprep.subr.bf16.mxu0 %v671
      %701 = vmatpush1.bf16.msra.mxu0 %v670
      %702 = vmatprep.subr.bf16.mxu0 %v667
      %703 = vmatpush1.bf16.msra.mxu0 %v666
      %704 = vmatprep.subr.bf16.mxu0 0
      %705 = vmatpush2.bf16.msra.mxu0 0
      %706 = vmatprep.subr.bf16.mxu0 0
      %707 = vmatpush2.bf16.msra.mxu0 0
      %708 = vmatprep.subr.bf16.mxu0 0
      %709 = vmatpush2.bf16.msra.mxu0 0
      %710 = vmatprep.subr.bf16.mxu0 0
      %711 = vmatpush2.bf16.msra.mxu0 0
      %712 = vmatprep.subr.bf16.mxu0 0
      %713 = vmatpush2.bf16.msra.mxu0 0
      %714 = vmatprep.subr.bf16.mxu0 0
      %715 = vmatpush2.bf16.msra.mxu0 0
      %716 = vmatprep.subr.bf16.mxu0 0
      %717 = vmatpush2.bf16.msra.mxu0 0
      %718 = vmatprep.subr.bf16.mxu0 0
      %719 = vmatpush2.bf16.msra.mxu0 0
      %720 = vmatprep.mubr.bf16.mxu0 0
      %721 = vmatmul.mubr.bf16.gmra.mxu0 %v683
      %v722 = vpop.f32.mrf.mxu0
      %v723 = vadd.f32 %v554, %v722
      %v724 = vpop.f32.mrf.mxu0
      %v725 = vadd.f32 %v556, %v724
      %v726 = vpop.f32.mrf.mxu0
      %v727 = vadd.f32 %v558, %v726
      %v728 = vpop.f32.mrf.mxu0
      %v729 = vadd.f32 %v560, %v728
      %730 = vmatprep.mubr.bf16.mxu0 0
      %731 = vmatmul.mubr.bf16.gmra.mxu0 %v686
      %v732 = vpop.f32.mrf.mxu0
      %v733 = vadd.f32 %v564, %v732
      %v734 = vpop.f32.mrf.mxu0
      %v735 = vadd.f32 %v566, %v734
      %v736 = vpop.f32.mrf.mxu0
      %v737 = vadd.f32 %v568, %v736
      %v738 = vpop.f32.mrf.mxu0
      %v739 = vadd.f32 %v570, %v738
      %740 = vdwg.mxu0
      %741 = vmatprep.subr.bf16.mxu0 0
      %742 = vmatpush1.bf16.msra.mxu0 0
      %743 = vmatprep.subr.bf16.mxu0 0
      %744 = vmatpush1.bf16.msra.mxu0 0
      %745 = vmatprep.subr.bf16.mxu0 0
      %746 = vmatpush1.bf16.msra.mxu0 0
      %747 = vmatprep.subr.bf16.mxu0 0
      %748 = vmatpush1.bf16.msra.mxu0 0
      %749 = vmatprep.subr.bf16.mxu0 0
      %750 = vmatpush1.bf16.msra.mxu0 0
      %751 = vmatprep.subr.bf16.mxu0 0
      %752 = vmatpush1.bf16.msra.mxu0 0
      %753 = vmatprep.subr.bf16.mxu0 %v673
      %754 = vmatpush1.bf16.msra.mxu0 %v672
      %755 = vmatprep.subr.bf16.mxu0 %v669
      %756 = vmatpush1.bf16.msra.mxu0 %v668
      %757 = vmatprep.subr.bf16.mxu0 0
      %758 = vmatpush2.bf16.msra.mxu0 0
      %759 = vmatprep.subr.bf16.mxu0 0
      %760 = vmatpush2.bf16.msra.mxu0 0
      %761 = vmatprep.subr.bf16.mxu0 0
      %762 = vmatpush2.bf16.msra.mxu0 0
      %763 = vmatprep.subr.bf16.mxu0 0
      %764 = vmatpush2.bf16.msra.mxu0 0
      %765 = vmatprep.subr.bf16.mxu0 0
      %766 = vmatpush2.bf16.msra.mxu0 0
      %767 = vmatprep.subr.bf16.mxu0 0
      %768 = vmatpush2.bf16.msra.mxu0 0
      %769 = vmatprep.subr.bf16.mxu0 0
      %770 = vmatpush2.bf16.msra.mxu0 0
      %771 = vmatprep.subr.bf16.mxu0 0
      %772 = vmatpush2.bf16.msra.mxu0 0
      %773 = vmatprep.mubr.bf16.mxu0 0
      %774 = vmatmul.mubr.bf16.gmra.mxu0 %v683
      %v775 = vpop.f32.mrf.mxu0
      %v776 = vadd.f32 %v607, %v775
      %v777 = vpop.f32.mrf.mxu0
      %v778 = vadd.f32 %v609, %v777
      %v779 = vpop.f32.mrf.mxu0
      %v780 = vadd.f32 %v611, %v779
      %v781 = vpop.f32.mrf.mxu0
      %v782 = vadd.f32 %v613, %v781
      %783 = vmatprep.mubr.bf16.mxu0 0
      %784 = vmatmul.mubr.bf16.gmra.mxu0 %v686
      %v785 = vpop.f32.mrf.mxu0
      %v786 = vadd.f32 %v617, %v785
      %v787 = vpop.f32.mrf.mxu0
      %v788 = vadd.f32 %v619, %v787
      %v789 = vpop.f32.mrf.mxu0
      %v790 = vadd.f32 %v621, %v789
      %v791 = vpop.f32.mrf.mxu0
      %v792 = vadd.f32 %v623, %v791
      %793 = vdwg.mxu0
      %s794 = scalar_lea.vmem %s4, 2
      %v795 = vld [vmem:[%s794] ss:$8 sm:$0xf]
      %v797 = vlaneseq
      %v798 = vshrl.u32 %v797, 7
      %v799 = vsub.s32 0, %v798
      %v800 = vrot.slane %v795, %v799
      %v801 = vlaneseq
      %v802 = vshrl.u32 %v801, 7
      %v803 = vsub.s32 1, %v802
      %v804 = vrot.slane %v795, %v803
      %v805 = vlaneseq
      %v806 = vshrl.u32 %v805, 7
      %v807 = vsub.s32 2, %v806
      %v808 = vrot.slane %v795, %v807
      %v809 = vlaneseq
      %v810 = vshrl.u32 %v809, 7
      %v811 = vsub.s32 3, %v810
      %v812 = vrot.slane %v795, %v811
      %813 = vrot.lane.b32.xlu0 %v800, 113
      %v814 = vpop.permute.xlu0 %813
      %815 = vrot.lane.b32.xlu0 %v804, 113
      %v816 = vpop.permute.xlu0 %815
      %817 = vrot.lane.b32.xlu0 %v808, 113
      %v818 = vpop.permute.xlu0 %817
      %819 = vrot.lane.b32.xlu0 %v812, 113
      %v820 = vpop.permute.xlu0 %819
      %vm821 = vcmask 924672
      %v822 = vsel %vm821, %v814, %v816
      %v823 = vsel %vm821, %v816, %v818
      %v824 = vsel %vm821, %v818, %v820
      %v830 = vmul.f32 %v295, %v814
      %v831 = vmul.f32 %v296, %v822
      %v832 = vmul.f32 %v297, %v823
      %v833 = vmul.f32 %v298, %v824
      %v834 = vmul.f32 %v299, %v820
      %v835 = vmul.f32 %v300, %v814
      %v836 = vmul.f32 %v301, %v822
      %v837 = vmul.f32 %v302, %v823
      %v838 = vmul.f32 %v303, %v824
      %v839 = vmul.f32 %v304, %v820
      %v840 = vmul.f32 %v305, %v814
      %v841 = vmul.f32 %v306, %v822
      %v842 = vmul.f32 %v307, %v823
      %v843 = vmul.f32 %v308, %v824
      %v844 = vmul.f32 %v309, %v820
      %v845 = vmul.f32 %v310, %v814
      %v846 = vmul.f32 %v311, %v822
      %v847 = vmul.f32 %v312, %v823
      %v848 = vmul.f32 %v313, %v824
      %v849 = vmul.f32 %v314, %v820
      %s850 = scalar_lea.vmem %s239, 32
      %v851 = vld [vmem:[%s850] sm:$0xf]
      %v852 = vld [vmem:[%s850 + $0x4] sm:$0xf]
      %v853 = vld [vmem:[%s850 + $0x8] sm:$0xf]
      %v854 = vld [vmem:[%s850 + $0xc] sm:$0xf]
      %v855 = vpack.c.bf16 %v835, %v830
      %v856 = vpack.c.bf16 %v836, %v831
      %v857 = vpack.c.bf16 %v837, %v832
      %v858 = vpack.c.bf16 %v838, %v833
      %v859 = vpack.c.bf16 %v839, %v834
      %v860 = vpack.c.bf16 %v845, %v840
      %v861 = vpack.c.bf16 %v846, %v841
      %v862 = vpack.c.bf16 %v847, %v842
      %v863 = vpack.c.bf16 %v848, %v843
      %v864 = vpack.c.bf16 %v849, %v844
      %v869 = vunpack.c.l.b16 %v851
      %v870 = vunpack.c.l.b16 %v852
      %v871 = vunpack.c.l.b16 %v853
      %v872 = vunpack.c.l.b16 %v854
      %v873 = vpack.c.b16 %v870, %v869
      %v874 = vpack.c.b16 %v872, %v871
      %885 = vrot.lane.b32.xlu0 %v855, 15
      %v886 = vpop.permute.xlu0 %885
      %887 = vrot.lane.b32.xlu0 %v856, 15
      %v888 = vpop.permute.xlu0 %887
      %889 = vrot.lane.b32.xlu0 %v857, 15
      %v890 = vpop.permute.xlu0 %889
      %891 = vrot.lane.b32.xlu0 %v858, 15
      %v892 = vpop.permute.xlu0 %891
      %893 = vrot.lane.b32.xlu0 %v859, 15
      %v894 = vpop.permute.xlu0 %893
      %895 = vrot.lane.b32.xlu0 %v860, 15
      %v896 = vpop.permute.xlu0 %895
      %897 = vrot.lane.b32.xlu0 %v861, 15
      %v898 = vpop.permute.xlu0 %897
      %899 = vrot.lane.b32.xlu0 %v862, 15
      %v900 = vpop.permute.xlu0 %899
      %901 = vrot.lane.b32.xlu0 %v863, 15
      %v902 = vpop.permute.xlu0 %901
      %903 = vrot.lane.b32.xlu0 %v864, 15
      %v904 = vpop.permute.xlu0 %903
      %vm905 = vcmask 121856
      %v906 = vsel %vm905, %v886, %v888
      %v907 = vsel %vm905, %v888, %v890
      %v908 = vsel %vm905, %v890, %v892
      %v909 = vsel %vm905, %v892, %v894
      %v910 = vsel %vm905, %v896, %v898
      %v911 = vsel %vm905, %v898, %v900
      %v912 = vsel %vm905, %v900, %v902
      %v913 = vsel %vm905, %v902, %v904
      %v923 = vsel %vm512, %v873, 0
      %v926 = vsel %vm512, %v874, 0
      %928 = vmatprep.subr.bf16.mxu0 0
      %929 = vmatpush1.bf16.msra.mxu0 0
      %930 = vmatprep.subr.bf16.mxu0 0
      %931 = vmatpush1.bf16.msra.mxu0 0
      %932 = vmatprep.subr.bf16.mxu0 0
      %933 = vmatpush1.bf16.msra.mxu0 0
      %934 = vmatprep.subr.bf16.mxu0 0
      %935 = vmatpush1.bf16.msra.mxu0 0
      %936 = vmatprep.subr.bf16.mxu0 0
      %937 = vmatpush1.bf16.msra.mxu0 0
      %938 = vmatprep.subr.bf16.mxu0 0
      %939 = vmatpush1.bf16.msra.mxu0 0
      %940 = vmatprep.subr.bf16.mxu0 %v911
      %941 = vmatpush1.bf16.msra.mxu0 %v910
      %942 = vmatprep.subr.bf16.mxu0 %v907
      %943 = vmatpush1.bf16.msra.mxu0 %v906
      %944 = vmatprep.subr.bf16.mxu0 0
      %945 = vmatpush2.bf16.msra.mxu0 0
      %946 = vmatprep.subr.bf16.mxu0 0
      %947 = vmatpush2.bf16.msra.mxu0 0
      %948 = vmatprep.subr.bf16.mxu0 0
      %949 = vmatpush2.bf16.msra.mxu0 0
      %950 = vmatprep.subr.bf16.mxu0 0
      %951 = vmatpush2.bf16.msra.mxu0 0
      %952 = vmatprep.subr.bf16.mxu0 0
      %953 = vmatpush2.bf16.msra.mxu0 0
      %954 = vmatprep.subr.bf16.mxu0 0
      %955 = vmatpush2.bf16.msra.mxu0 0
      %956 = vmatprep.subr.bf16.mxu0 0
      %957 = vmatpush2.bf16.msra.mxu0 0
      %958 = vmatprep.subr.bf16.mxu0 0
      %959 = vmatpush2.bf16.msra.mxu0 0
      %960 = vmatprep.mubr.bf16.mxu0 0
      %961 = vmatmul.mubr.bf16.gmra.mxu0 %v923
      %v962 = vpop.f32.mrf.mxu0
      %v963 = vadd.f32 0.0, %v962
      %v964 = vpop.f32.mrf.mxu0
      %v965 = vadd.f32 0.0, %v964
      %v966 = vpop.f32.mrf.mxu0
      %v967 = vadd.f32 0.0, %v966
      %v968 = vpop.f32.mrf.mxu0
      %v969 = vadd.f32 0.0, %v968
      %970 = vmatprep.mubr.bf16.mxu0 0
      %971 = vmatmul.mubr.bf16.gmra.mxu0 %v926
      %v972 = vpop.f32.mrf.mxu0
      %v973 = vadd.f32 0.0, %v972
      %v974 = vpop.f32.mrf.mxu0
      %v975 = vadd.f32 0.0, %v974
      %v976 = vpop.f32.mrf.mxu0
      %v977 = vadd.f32 0.0, %v976
      %v978 = vpop.f32.mrf.mxu0
      %v979 = vadd.f32 0.0, %v978
      %980 = vdwg.mxu0
      %981 = vmatprep.subr.bf16.mxu0 0
      %982 = vmatpush1.bf16.msra.mxu0 0
      %983 = vmatprep.subr.bf16.mxu0 0
      %984 = vmatpush1.bf16.msra.mxu0 0
      %985 = vmatprep.subr.bf16.mxu0 0
      %986 = vmatpush1.bf16.msra.mxu0 0
      %987 = vmatprep.subr.bf16.mxu0 0
      %988 = vmatpush1.bf16.msra.mxu0 0
      %989 = vmatprep.subr.bf16.mxu0 0
      %990 = vmatpush1.bf16.msra.mxu0 0
      %991 = vmatprep.subr.bf16.mxu0 0
      %992 = vmatpush1.bf16.msra.mxu0 0
      %993 = vmatprep.subr.bf16.mxu0 %v913
      %994 = vmatpush1.bf16.msra.mxu0 %v912
      %995 = vmatprep.subr.bf16.mxu0 %v909
      %996 = vmatpush1.bf16.msra.mxu0 %v908
      %997 = vmatprep.subr.bf16.mxu0 0
      %998 = vmatpush2.bf16.msra.mxu0 0
      %999 = vmatprep.subr.bf16.mxu0 0
      %1000 = vmatpush2.bf16.msra.mxu0 0
      %1001 = vmatprep.subr.bf16.mxu0 0
      %1002 = vmatpush2.bf16.msra.mxu0 0
      %1003 = vmatprep.subr.bf16.mxu0 0
      %1004 = vmatpush2.bf16.msra.mxu0 0
      %1005 = vmatprep.subr.bf16.mxu0 0
      %1006 = vmatpush2.bf16.msra.mxu0 0
      %1007 = vmatprep.subr.bf16.mxu0 0
      %1008 = vmatpush2.bf16.msra.mxu0 0
      %1009 = vmatprep.subr.bf16.mxu0 0
      %1010 = vmatpush2.bf16.msra.mxu0 0
      %1011 = vmatprep.subr.bf16.mxu0 0
      %1012 = vmatpush2.bf16.msra.mxu0 0
      %1013 = vmatprep.mubr.bf16.mxu0 0
      %1014 = vmatmul.mubr.bf16.gmra.mxu0 %v923
      %v1015 = vpop.f32.mrf.mxu0
      %v1016 = vadd.f32 0.0, %v1015
      %v1017 = vpop.f32.mrf.mxu0
      %v1018 = vadd.f32 0.0, %v1017
      %v1019 = vpop.f32.mrf.mxu0
      %v1020 = vadd.f32 0.0, %v1019
      %v1021 = vpop.f32.mrf.mxu0
      %v1022 = vadd.f32 0.0, %v1021
      %1023 = vmatprep.mubr.bf16.mxu0 0
      %1024 = vmatmul.mubr.bf16.gmra.mxu0 %v926
      %v1025 = vpop.f32.mrf.mxu0
      %v1026 = vadd.f32 0.0, %v1025
      %v1027 = vpop.f32.mrf.mxu0
      %v1028 = vadd.f32 0.0, %v1027
      %v1029 = vpop.f32.mrf.mxu0
      %v1030 = vadd.f32 0.0, %v1029
      %v1031 = vpop.f32.mrf.mxu0
      %v1032 = vadd.f32 0.0, %v1031
      %1033 = vdwg.mxu0
      %v1034 = vadd.f32 %v723, %v963
      %v1035 = vadd.f32 %v725, %v965
      %v1036 = vadd.f32 %v776, %v1016
      %v1037 = vadd.f32 %v778, %v1018
      %v1038 = vadd.f32 %v727, %v967
      %v1039 = vadd.f32 %v729, %v969
      %v1040 = vadd.f32 %v780, %v1020
      %v1041 = vadd.f32 %v782, %v1022
      %v1042 = vadd.f32 %v733, %v973
      %v1043 = vadd.f32 %v735, %v975
      %v1044 = vadd.f32 %v786, %v1026
      %v1045 = vadd.f32 %v788, %v1028
      %v1046 = vadd.f32 %v737, %v977
      %v1047 = vadd.f32 %v739, %v979
      %v1048 = vadd.f32 %v790, %v1030
      %v1049 = vadd.f32 %v792, %v1032
      %s1050 = scalar_lea.vmem %s4, 3
      %v1051 = vld [vmem:[%s1050] ss:$8 sm:$0xf]
      %v1053 = vlaneseq
      %v1054 = vshrl.u32 %v1053, 7
      %v1055 = vsub.s32 0, %v1054
      %v1056 = vrot.slane %v1051, %v1055
      %v1057 = vlaneseq
      %v1058 = vshrl.u32 %v1057, 7
      %v1059 = vsub.s32 1, %v1058
      %v1060 = vrot.slane %v1051, %v1059
      %v1061 = vlaneseq
      %v1062 = vshrl.u32 %v1061, 7
      %v1063 = vsub.s32 2, %v1062
      %v1064 = vrot.slane %v1051, %v1063
      %v1065 = vlaneseq
      %v1066 = vshrl.u32 %v1065, 7
      %v1067 = vsub.s32 3, %v1066
      %v1068 = vrot.slane %v1051, %v1067
      %1069 = vrot.lane.b32.xlu0 %v1056, 127
      %v1070 = vpop.permute.xlu0 %1069
      %1071 = vrot.lane.b32.xlu0 %v1060, 127
      %v1072 = vpop.permute.xlu0 %1071
      %1073 = vrot.lane.b32.xlu0 %v1064, 127
      %v1074 = vpop.permute.xlu0 %1073
      %1075 = vrot.lane.b32.xlu0 %v1068, 127
      %v1076 = vpop.permute.xlu0 %1075
      %vm1077 = vcmask 1039360
      %v1078 = vsel %vm1077, %v1070, %v1072
      %v1079 = vsel %vm1077, %v1072, %v1074
      %v1080 = vsel %vm1077, %v1074, %v1076
      %v1086 = vmul.f32 %v295, %v1070
      %v1087 = vmul.f32 %v296, %v1078
      %v1088 = vmul.f32 %v297, %v1079
      %v1089 = vmul.f32 %v298, %v1080
      %v1090 = vmul.f32 %v299, %v1076
      %v1091 = vmul.f32 %v300, %v1070
      %v1092 = vmul.f32 %v301, %v1078
      %v1093 = vmul.f32 %v302, %v1079
      %v1094 = vmul.f32 %v303, %v1080
      %v1095 = vmul.f32 %v304, %v1076
      %v1096 = vmul.f32 %v305, %v1070
      %v1097 = vmul.f32 %v306, %v1078
      %v1098 = vmul.f32 %v307, %v1079
      %v1099 = vmul.f32 %v308, %v1080
      %v1100 = vmul.f32 %v309, %v1076
      %v1101 = vmul.f32 %v310, %v1070
      %v1102 = vmul.f32 %v311, %v1078
      %v1103 = vmul.f32 %v312, %v1079
      %v1104 = vmul.f32 %v313, %v1080
      %v1105 = vmul.f32 %v314, %v1076
      %s1106 = scalar_lea.vmem %s239, 48
      %v1107 = vld [vmem:[%s1106] sm:$0xf]
      %v1108 = vld [vmem:[%s1106 + $0x4] sm:$0xf]
      %v1109 = vld [vmem:[%s1106 + $0x8] sm:$0xf]
      %v1110 = vld [vmem:[%s1106 + $0xc] sm:$0xf]
      %v1111 = vpack.c.bf16 %v1091, %v1086
      %v1112 = vpack.c.bf16 %v1092, %v1087
      %v1113 = vpack.c.bf16 %v1093, %v1088
      %v1114 = vpack.c.bf16 %v1094, %v1089
      %v1115 = vpack.c.bf16 %v1095, %v1090
      %v1116 = vpack.c.bf16 %v1101, %v1096
      %v1117 = vpack.c.bf16 %v1102, %v1097
      %v1118 = vpack.c.bf16 %v1103, %v1098
      %v1119 = vpack.c.bf16 %v1104, %v1099
      %v1120 = vpack.c.bf16 %v1105, %v1100
      %v1125 = vunpack.c.l.b16 %v1107
      %v1126 = vunpack.c.l.b16 %v1108
      %v1127 = vunpack.c.l.b16 %v1109
      %v1128 = vunpack.c.l.b16 %v1110
      %v1129 = vpack.c.b16 %v1126, %v1125
      %v1130 = vpack.c.b16 %v1128, %v1127
      %1141 = vrot.lane.b32.xlu0 %v1111, 1
      %v1142 = vpop.permute.xlu0 %1141
      %1143 = vrot.lane.b32.xlu0 %v1112, 1
      %v1144 = vpop.permute.xlu0 %1143
      %1145 = vrot.lane.b32.xlu0 %v1113, 1
      %v1146 = vpop.permute.xlu0 %1145
      %1147 = vrot.lane.b32.xlu0 %v1114, 1
      %v1148 = vpop.permute.xlu0 %1147
      %1149 = vrot.lane.b32.xlu0 %v1115, 1
      %v1150 = vpop.permute.xlu0 %1149
      %1151 = vrot.lane.b32.xlu0 %v1116, 1
      %v1152 = vpop.permute.xlu0 %1151
      %1153 = vrot.lane.b32.xlu0 %v1117, 1
      %v1154 = vpop.permute.xlu0 %1153
      %1155 = vrot.lane.b32.xlu0 %v1118, 1
      %v1156 = vpop.permute.xlu0 %1155
      %1157 = vrot.lane.b32.xlu0 %v1119, 1
      %v1158 = vpop.permute.xlu0 %1157
      %1159 = vrot.lane.b32.xlu0 %v1120, 1
      %v1160 = vpop.permute.xlu0 %1159
      %vm1161 = vcmask 7168
      %v1162 = vsel %vm1161, %v1142, %v1144
      %v1163 = vsel %vm1161, %v1144, %v1146
      %v1164 = vsel %vm1161, %v1146, %v1148
      %v1165 = vsel %vm1161, %v1148, %v1150
      %v1166 = vsel %vm1161, %v1152, %v1154
      %v1167 = vsel %vm1161, %v1154, %v1156
      %v1168 = vsel %vm1161, %v1156, %v1158
      %v1169 = vsel %vm1161, %v1158, %v1160
      %v1179 = vsel %vm512, %v1129, 0
      %v1182 = vsel %vm512, %v1130, 0
      %1184 = vmatprep.subr.bf16.mxu0 0
      %1185 = vmatpush1.bf16.msra.mxu0 0
      %1186 = vmatprep.subr.bf16.mxu0 0
      %1187 = vmatpush1.bf16.msra.mxu0 0
      %1188 = vmatprep.subr.bf16.mxu0 0
      %1189 = vmatpush1.bf16.msra.mxu0 0
      %1190 = vmatprep.subr.bf16.mxu0 0
      %1191 = vmatpush1.bf16.msra.mxu0 0
      %1192 = vmatprep.subr.bf16.mxu0 0
      %1193 = vmatpush1.bf16.msra.mxu0 0
      %1194 = vmatprep.subr.bf16.mxu0 0
      %1195 = vmatpush1.bf16.msra.mxu0 0
      %1196 = vmatprep.subr.bf16.mxu0 %v1167
      %1197 = vmatpush1.bf16.msra.mxu0 %v1166
      %1198 = vmatprep.subr.bf16.mxu0 %v1163
      %1199 = vmatpush1.bf16.msra.mxu0 %v1162
      %1200 = vmatprep.subr.bf16.mxu0 0
      %1201 = vmatpush2.bf16.msra.mxu0 0
      %1202 = vmatprep.subr.bf16.mxu0 0
      %1203 = vmatpush2.bf16.msra.mxu0 0
      %1204 = vmatprep.subr.bf16.mxu0 0
      %1205 = vmatpush2.bf16.msra.mxu0 0
      %1206 = vmatprep.subr.bf16.mxu0 0
      %1207 = vmatpush2.bf16.msra.mxu0 0
      %1208 = vmatprep.subr.bf16.mxu0 0
      %1209 = vmatpush2.bf16.msra.mxu0 0
      %1210 = vmatprep.subr.bf16.mxu0 0
      %1211 = vmatpush2.bf16.msra.mxu0 0
      %1212 = vmatprep.subr.bf16.mxu0 0
      %1213 = vmatpush2.bf16.msra.mxu0 0
      %1214 = vmatprep.subr.bf16.mxu0 0
      %1215 = vmatpush2.bf16.msra.mxu0 0
      %1216 = vmatprep.mubr.bf16.mxu0 0
      %1217 = vmatmul.mubr.bf16.gmra.mxu0 %v1179
      %v1218 = vpop.f32.mrf.mxu0
      %v1219 = vadd.f32 0.0, %v1218
      %v1220 = vpop.f32.mrf.mxu0
      %v1221 = vadd.f32 0.0, %v1220
      %v1222 = vpop.f32.mrf.mxu0
      %v1223 = vadd.f32 0.0, %v1222
      %v1224 = vpop.f32.mrf.mxu0
      %v1225 = vadd.f32 0.0, %v1224
      %1226 = vmatprep.mubr.bf16.mxu0 0
      %1227 = vmatmul.mubr.bf16.gmra.mxu0 %v1182
      %v1228 = vpop.f32.mrf.mxu0
      %v1229 = vadd.f32 0.0, %v1228
      %v1230 = vpop.f32.mrf.mxu0
      %v1231 = vadd.f32 0.0, %v1230
      %v1232 = vpop.f32.mrf.mxu0
      %v1233 = vadd.f32 0.0, %v1232
      %v1234 = vpop.f32.mrf.mxu0
      %v1235 = vadd.f32 0.0, %v1234
      %1236 = vdwg.mxu0
      %1237 = vmatprep.subr.bf16.mxu0 0
      %1238 = vmatpush1.bf16.msra.mxu0 0
      %1239 = vmatprep.subr.bf16.mxu0 0
      %1240 = vmatpush1.bf16.msra.mxu0 0
      %1241 = vmatprep.subr.bf16.mxu0 0
      %1242 = vmatpush1.bf16.msra.mxu0 0
      %1243 = vmatprep.subr.bf16.mxu0 0
      %1244 = vmatpush1.bf16.msra.mxu0 0
      %1245 = vmatprep.subr.bf16.mxu0 0
      %1246 = vmatpush1.bf16.msra.mxu0 0
      %1247 = vmatprep.subr.bf16.mxu0 0
      %1248 = vmatpush1.bf16.msra.mxu0 0
      %1249 = vmatprep.subr.bf16.mxu0 %v1169
      %1250 = vmatpush1.bf16.msra.mxu0 %v1168
      %1251 = vmatprep.subr.bf16.mxu0 %v1165
      %1252 = vmatpush1.bf16.msra.mxu0 %v1164
      %1253 = vmatprep.subr.bf16.mxu0 0
      %1254 = vmatpush2.bf16.msra.mxu0 0
      %1255 = vmatprep.subr.bf16.mxu0 0
      %1256 = vmatpush2.bf16.msra.mxu0 0
      %1257 = vmatprep.subr.bf16.mxu0 0
      %1258 = vmatpush2.bf16.msra.mxu0 0
      %1259 = vmatprep.subr.bf16.mxu0 0
      %1260 = vmatpush2.bf16.msra.mxu0 0
      %1261 = vmatprep.subr.bf16.mxu0 0
      %1262 = vmatpush2.bf16.msra.mxu0 0
      %1263 = vmatprep.subr.bf16.mxu0 0
      %1264 = vmatpush2.bf16.msra.mxu0 0
      %1265 = vmatprep.subr.bf16.mxu0 0
      %1266 = vmatpush2.bf16.msra.mxu0 0
      %1267 = vmatprep.subr.bf16.mxu0 0
      %1268 = vmatpush2.bf16.msra.mxu0 0
      %1269 = vmatprep.mubr.bf16.mxu0 0
      %1270 = vmatmul.mubr.bf16.gmra.mxu0 %v1179
      %v1271 = vpop.f32.mrf.mxu0
      %v1272 = vadd.f32 0.0, %v1271
      %v1273 = vpop.f32.mrf.mxu0
      %v1274 = vadd.f32 0.0, %v1273
      %v1275 = vpop.f32.mrf.mxu0
      %v1276 = vadd.f32 0.0, %v1275
      %v1277 = vpop.f32.mrf.mxu0
      %v1278 = vadd.f32 0.0, %v1277
      %1279 = vmatprep.mubr.bf16.mxu0 0
      %1280 = vmatmul.mubr.bf16.gmra.mxu0 %v1182
      %v1281 = vpop.f32.mrf.mxu0
      %v1282 = vadd.f32 0.0, %v1281
      %v1283 = vpop.f32.mrf.mxu0
      %v1284 = vadd.f32 0.0, %v1283
      %v1285 = vpop.f32.mrf.mxu0
      %v1286 = vadd.f32 0.0, %v1285
      %v1287 = vpop.f32.mrf.mxu0
      %v1288 = vadd.f32 0.0, %v1287
      %1289 = vdwg.mxu0
      %v1290 = vadd.f32 %v1034, %v1219
      %v1291 = vadd.f32 %v1035, %v1221
      %v1292 = vadd.f32 %v1036, %v1272
      %v1293 = vadd.f32 %v1037, %v1274
      %v1294 = vadd.f32 %v1038, %v1223
      %v1295 = vadd.f32 %v1039, %v1225
      %v1296 = vadd.f32 %v1040, %v1276
      %v1297 = vadd.f32 %v1041, %v1278
      %v1298 = vadd.f32 %v1042, %v1229
      %v1299 = vadd.f32 %v1043, %v1231
      %v1300 = vadd.f32 %v1044, %v1282
      %v1301 = vadd.f32 %v1045, %v1284
      %v1302 = vadd.f32 %v1046, %v1233
      %v1303 = vadd.f32 %v1047, %v1235
      %v1304 = vadd.f32 %v1048, %v1286
      %v1305 = vadd.f32 %v1049, %v1288
      %s1306 = scalar_lea.vmem %s239, 64
      %v1307 = vld [vmem:[%s1306] sm:$0xf]
      %v1308 = vld [vmem:[%s1306 + $0x4] sm:$0xf]
      %v1309 = vld [vmem:[%s1306 + $0x8] sm:$0xf]
      %v1310 = vld [vmem:[%s1306 + $0xc] sm:$0xf]
      %v1311 = vpack.c.bf16 %v301, %v296
      %v1312 = vpack.c.bf16 %v302, %v297
      %v1313 = vpack.c.bf16 %v303, %v298
      %v1314 = vpack.c.bf16 %v304, %v299
      %v1315 = vpack.c.bf16 %v311, %v306
      %v1316 = vpack.c.bf16 %v312, %v307
      %v1317 = vpack.c.bf16 %v313, %v308
      %v1318 = vpack.c.bf16 %v314, %v309
      %v1323 = vunpack.c.l.b16 %v1307
      %v1324 = vunpack.c.l.b16 %v1308
      %v1325 = vunpack.c.l.b16 %v1309
      %v1326 = vunpack.c.l.b16 %v1310
      %v1327 = vpack.c.b16 %v1324, %v1323
      %v1328 = vpack.c.b16 %v1326, %v1325
      %v1330 = vsel %vm512, %v1327, 0
      %v1333 = vsel %vm512, %v1328, 0
      %1335 = vmatprep.subr.bf16.mxu0 0
      %1336 = vmatpush1.bf16.msra.mxu0 0
      %1337 = vmatprep.subr.bf16.mxu0 0
      %1338 = vmatpush1.bf16.msra.mxu0 0
      %1339 = vmatprep.subr.bf16.mxu0 0
      %1340 = vmatpush1.bf16.msra.mxu0 0
      %1341 = vmatprep.subr.bf16.mxu0 0
      %1342 = vmatpush1.bf16.msra.mxu0 0
      %1343 = vmatprep.subr.bf16.mxu0 0
      %1344 = vmatpush1.bf16.msra.mxu0 0
      %1345 = vmatprep.subr.bf16.mxu0 0
      %1346 = vmatpush1.bf16.msra.mxu0 0
      %1347 = vmatprep.subr.bf16.mxu0 %v1316
      %1348 = vmatpush1.bf16.msra.mxu0 %v1315
      %1349 = vmatprep.subr.bf16.mxu0 %v1312
      %1350 = vmatpush1.bf16.msra.mxu0 %v1311
      %1351 = vmatprep.subr.bf16.mxu0 0
      %1352 = vmatpush2.bf16.msra.mxu0 0
      %1353 = vmatprep.subr.bf16.mxu0 0
      %1354 = vmatpush2.bf16.msra.mxu0 0
      %1355 = vmatprep.subr.bf16.mxu0 0
      %1356 = vmatpush2.bf16.msra.mxu0 0
      %1357 = vmatprep.subr.bf16.mxu0 0
      %1358 = vmatpush2.bf16.msra.mxu0 0
      %1359 = vmatprep.subr.bf16.mxu0 0
      %1360 = vmatpush2.bf16.msra.mxu0 0
      %1361 = vmatprep.subr.bf16.mxu0 0
      %1362 = vmatpush2.bf16.msra.mxu0 0
      %1363 = vmatprep.subr.bf16.mxu0 0
      %1364 = vmatpush2.bf16.msra.mxu0 0
      %1365 = vmatprep.subr.bf16.mxu0 0
      %1366 = vmatpush2.bf16.msra.mxu0 0
      %1367 = vmatprep.mubr.bf16.mxu0 0
      %1368 = vmatmul.mubr.bf16.gmra.mxu0 %v1330
      %v1369 = vpop.f32.mrf.mxu0
      %v1370 = vadd.f32 0.0, %v1369
      %v1371 = vpop.f32.mrf.mxu0
      %v1372 = vadd.f32 0.0, %v1371
      %v1373 = vpop.f32.mrf.mxu0
      %v1374 = vadd.f32 0.0, %v1373
      %v1375 = vpop.f32.mrf.mxu0
      %v1376 = vadd.f32 0.0, %v1375
      %1377 = vmatprep.mubr.bf16.mxu0 0
      %1378 = vmatmul.mubr.bf16.gmra.mxu0 %v1333
      %v1379 = vpop.f32.mrf.mxu0
      %v1380 = vadd.f32 0.0, %v1379
      %v1381 = vpop.f32.mrf.mxu0
      %v1382 = vadd.f32 0.0, %v1381
      %v1383 = vpop.f32.mrf.mxu0
      %v1384 = vadd.f32 0.0, %v1383
      %v1385 = vpop.f32.mrf.mxu0
      %v1386 = vadd.f32 0.0, %v1385
      %1387 = vdwg.mxu0
      %1388 = vmatprep.subr.bf16.mxu0 0
      %1389 = vmatpush1.bf16.msra.mxu0 0
      %1390 = vmatprep.subr.bf16.mxu0 0
      %1391 = vmatpush1.bf16.msra.mxu0 0
      %1392 = vmatprep.subr.bf16.mxu0 0
      %1393 = vmatpush1.bf16.msra.mxu0 0
      %1394 = vmatprep.subr.bf16.mxu0 0
      %1395 = vmatpush1.bf16.msra.mxu0 0
      %1396 = vmatprep.subr.bf16.mxu0 0
      %1397 = vmatpush1.bf16.msra.mxu0 0
      %1398 = vmatprep.subr.bf16.mxu0 0
      %1399 = vmatpush1.bf16.msra.mxu0 0
      %1400 = vmatprep.subr.bf16.mxu0 %v1318
      %1401 = vmatpush1.bf16.msra.mxu0 %v1317
      %1402 = vmatprep.subr.bf16.mxu0 %v1314
      %1403 = vmatpush1.bf16.msra.mxu0 %v1313
      %1404 = vmatprep.subr.bf16.mxu0 0
      %1405 = vmatpush2.bf16.msra.mxu0 0
      %1406 = vmatprep.subr.bf16.mxu0 0
      %1407 = vmatpush2.bf16.msra.mxu0 0
      %1408 = vmatprep.subr.bf16.mxu0 0
      %1409 = vmatpush2.bf16.msra.mxu0 0
      %1410 = vmatprep.subr.bf16.mxu0 0
      %1411 = vmatpush2.bf16.msra.mxu0 0
      %1412 = vmatprep.subr.bf16.mxu0 0
      %1413 = vmatpush2.bf16.msra.mxu0 0
      %1414 = vmatprep.subr.bf16.mxu0 0
      %1415 = vmatpush2.bf16.msra.mxu0 0
      %1416 = vmatprep.subr.bf16.mxu0 0
      %1417 = vmatpush2.bf16.msra.mxu0 0
      %1418 = vmatprep.subr.bf16.mxu0 0
      %1419 = vmatpush2.bf16.msra.mxu0 0
      %1420 = vmatprep.mubr.bf16.mxu0 0
      %1421 = vmatmul.mubr.bf16.gmra.mxu0 %v1330
      %v1422 = vpop.f32.mrf.mxu0
      %v1423 = vadd.f32 0.0, %v1422
      %v1424 = vpop.f32.mrf.mxu0
      %v1425 = vadd.f32 0.0, %v1424
      %v1426 = vpop.f32.mrf.mxu0
      %v1427 = vadd.f32 0.0, %v1426
      %v1428 = vpop.f32.mrf.mxu0
      %v1429 = vadd.f32 0.0, %v1428
      %1430 = vmatprep.mubr.bf16.mxu0 0
      %1431 = vmatmul.mubr.bf16.gmra.mxu0 %v1333
      %v1432 = vpop.f32.mrf.mxu0
      %v1433 = vadd.f32 0.0, %v1432
      %v1434 = vpop.f32.mrf.mxu0
      %v1435 = vadd.f32 0.0, %v1434
      %v1436 = vpop.f32.mrf.mxu0
      %v1437 = vadd.f32 0.0, %v1436
      %v1438 = vpop.f32.mrf.mxu0
      %v1439 = vadd.f32 0.0, %v1438
      %1440 = vdwg.mxu0
      %v1441 = vadd.f32 %v1290, %v1370
      %v1442 = vadd.f32 %v1291, %v1372
      %v1443 = vadd.f32 %v1292, %v1423
      %v1444 = vadd.f32 %v1293, %v1425
      %v1445 = vadd.f32 %v1294, %v1374
      %v1446 = vadd.f32 %v1295, %v1376
      %v1447 = vadd.f32 %v1296, %v1427
      %v1448 = vadd.f32 %v1297, %v1429
      %v1449 = vadd.f32 %v1298, %v1380
      %v1450 = vadd.f32 %v1299, %v1382
      %v1451 = vadd.f32 %v1300, %v1433
      %v1452 = vadd.f32 %v1301, %v1435
      %v1453 = vadd.f32 %v1302, %v1384
      %v1454 = vadd.f32 %v1303, %v1386
      %v1455 = vadd.f32 %v1304, %v1437
      %v1456 = vadd.f32 %v1305, %v1439
      %v1457 = vld [vmem:[#allocation2 + $0x8] sm:$0xff]
      %v1458 = vld [vmem:[#allocation2 + $0x10] sm:$0xff]
      %v1459 = vld [vmem:[#allocation2 + $0x18] sm:$0xff]
      %v1460 = vld [vmem:[#allocation2 + $0x20] sm:$0xff]
      %v1461 = vld [vmem:[#allocation2 + $0x28] sm:$0xff]
      %v1462 = vld [vmem:[#allocation2 + $0x38] sm:$0xff]
      %v1463 = vld [vmem:[#allocation2 + $0x40] sm:$0xff]
      %v1464 = vld [vmem:[#allocation2 + $0x48] sm:$0xff]
      %v1465 = vld [vmem:[#allocation2 + $0x50] sm:$0xff]
      %v1466 = vld [vmem:[#allocation2 + $0x58] sm:$0xff]
      %v1467 = vld [vmem:[#allocation2 + $0x68] sm:$0xff]
      %v1468 = vld [vmem:[#allocation2 + $0x70] sm:$0xff]
      %v1469 = vld [vmem:[#allocation2 + $0x78] sm:$0xff]
      %v1470 = vld [vmem:[#allocation2 + $0x80] sm:$0xff]
      %v1471 = vld [vmem:[#allocation2 + $0x88] sm:$0xff]
      %v1472 = vld [vmem:[#allocation2 + $0x98] sm:$0xff]
      %v1473 = vld [vmem:[#allocation2 + $0xa0] sm:$0xff]
      %v1474 = vld [vmem:[#allocation2 + $0xa8] sm:$0xff]
      %v1475 = vld [vmem:[#allocation2 + $0xb0] sm:$0xff]
      %v1476 = vld [vmem:[#allocation2 + $0xb8] sm:$0xff]
      %s1477 = scalar_lea.vmem %s4, 5
      %v1478 = vld [vmem:[%s1477] ss:$8 sm:$0xf]
      %v1480 = vlaneseq
      %v1481 = vshrl.u32 %v1480, 7
      %v1482 = vsub.s32 0, %v1481
      %v1483 = vrot.slane %v1478, %v1482
      %v1484 = vlaneseq
      %v1485 = vshrl.u32 %v1484, 7
      %v1486 = vsub.s32 1, %v1485
      %v1487 = vrot.slane %v1478, %v1486
      %v1488 = vlaneseq
      %v1489 = vshrl.u32 %v1488, 7
      %v1490 = vsub.s32 2, %v1489
      %v1491 = vrot.slane %v1478, %v1490
      %v1492 = vlaneseq
      %v1493 = vshrl.u32 %v1492, 7
      %v1494 = vsub.s32 3, %v1493
      %v1495 = vrot.slane %v1478, %v1494
      %1496 = vrot.lane.b32.xlu0 %v1483, 1
      %v1497 = vpop.permute.xlu0 %1496
      %1498 = vrot.lane.b32.xlu0 %v1487, 1
      %v1499 = vpop.permute.xlu0 %1498
      %1500 = vrot.lane.b32.xlu0 %v1491, 1
      %v1501 = vpop.permute.xlu0 %1500
      %1502 = vrot.lane.b32.xlu0 %v1495, 1
      %v1503 = vpop.permute.xlu0 %1502
      %vm1504 = vcmask 7168
      %v1505 = vsel %vm1504, %v1497, %v1499
      %v1506 = vsel %vm1504, %v1499, %v1501
      %v1507 = vsel %vm1504, %v1501, %v1503
      %v1513 = vmul.f32 %v1457, %v1497
      %v1514 = vmul.f32 %v1458, %v1505
      %v1515 = vmul.f32 %v1459, %v1506
      %v1516 = vmul.f32 %v1460, %v1507
      %v1517 = vmul.f32 %v1461, %v1503
      %v1518 = vmul.f32 %v1462, %v1497
      %v1519 = vmul.f32 %v1463, %v1505
      %v1520 = vmul.f32 %v1464, %v1506
      %v1521 = vmul.f32 %v1465, %v1507
      %v1522 = vmul.f32 %v1466, %v1503
      %v1523 = vmul.f32 %v1467, %v1497
      %v1524 = vmul.f32 %v1468, %v1505
      %v1525 = vmul.f32 %v1469, %v1506
      %v1526 = vmul.f32 %v1470, %v1507
      %v1527 = vmul.f32 %v1471, %v1503
      %v1528 = vmul.f32 %v1472, %v1497
      %v1529 = vmul.f32 %v1473, %v1505
      %v1530 = vmul.f32 %v1474, %v1506
      %v1531 = vmul.f32 %v1475, %v1507
      %v1532 = vmul.f32 %v1476, %v1503
      %s1533 = scalar_lea.vmem %s239, 80
      %v1534 = vld [vmem:[%s1533] sm:$0xf]
      %v1535 = vld [vmem:[%s1533 + $0x4] sm:$0xf]
      %v1536 = vld [vmem:[%s1533 + $0x8] sm:$0xf]
      %v1537 = vld [vmem:[%s1533 + $0xc] sm:$0xf]
      %v1538 = vpack.c.bf16 %v1518, %v1513
      %v1539 = vpack.c.bf16 %v1519, %v1514
      %v1540 = vpack.c.bf16 %v1520, %v1515
      %v1541 = vpack.c.bf16 %v1521, %v1516
      %v1542 = vpack.c.bf16 %v1522, %v1517
      %v1543 = vpack.c.bf16 %v1528, %v1523
      %v1544 = vpack.c.bf16 %v1529, %v1524
      %v1545 = vpack.c.bf16 %v1530, %v1525
      %v1546 = vpack.c.bf16 %v1531, %v1526
      %v1547 = vpack.c.bf16 %v1532, %v1527
      %v1552 = vunpack.c.l.b16 %v1534
      %v1553 = vunpack.c.l.b16 %v1535
      %v1554 = vunpack.c.l.b16 %v1536
      %v1555 = vunpack.c.l.b16 %v1537
      %v1556 = vpack.c.b16 %v1553, %v1552
      %v1557 = vpack.c.b16 %v1555, %v1554
      %1568 = vrot.lane.b32.xlu0 %v1538, 127
      %v1569 = vpop.permute.xlu0 %1568
      %1570 = vrot.lane.b32.xlu0 %v1539, 127
      %v1571 = vpop.permute.xlu0 %1570
      %1572 = vrot.lane.b32.xlu0 %v1540, 127
      %v1573 = vpop.permute.xlu0 %1572
      %1574 = vrot.lane.b32.xlu0 %v1541, 127
      %v1575 = vpop.permute.xlu0 %1574
      %1576 = vrot.lane.b32.xlu0 %v1542, 127
      %v1577 = vpop.permute.xlu0 %1576
      %1578 = vrot.lane.b32.xlu0 %v1543, 127
      %v1579 = vpop.permute.xlu0 %1578
      %1580 = vrot.lane.b32.xlu0 %v1544, 127
      %v1581 = vpop.permute.xlu0 %1580
      %1582 = vrot.lane.b32.xlu0 %v1545, 127
      %v1583 = vpop.permute.xlu0 %1582
      %1584 = vrot.lane.b32.xlu0 %v1546, 127
      %v1585 = vpop.permute.xlu0 %1584
      %1586 = vrot.lane.b32.xlu0 %v1547, 127
      %v1587 = vpop.permute.xlu0 %1586
      %vm1588 = vcmask 1039360
      %v1589 = vsel %vm1588, %v1569, %v1571
      %v1590 = vsel %vm1588, %v1571, %v1573
      %v1591 = vsel %vm1588, %v1573, %v1575
      %v1592 = vsel %vm1588, %v1575, %v1577
      %v1593 = vsel %vm1588, %v1579, %v1581
      %v1594 = vsel %vm1588, %v1581, %v1583
      %v1595 = vsel %vm1588, %v1583, %v1585
      %v1596 = vsel %vm1588, %v1585, %v1587
      %v1606 = vsel %vm512, %v1556, 0
      %v1609 = vsel %vm512, %v1557, 0
      %1611 = vmatprep.subr.bf16.mxu0 0
      %1612 = vmatpush1.bf16.msra.mxu0 0
      %1613 = vmatprep.subr.bf16.mxu0 0
      %1614 = vmatpush1.bf16.msra.mxu0 0
      %1615 = vmatprep.subr.bf16.mxu0 0
      %1616 = vmatpush1.bf16.msra.mxu0 0
      %1617 = vmatprep.subr.bf16.mxu0 0
      %1618 = vmatpush1.bf16.msra.mxu0 0
      %1619 = vmatprep.subr.bf16.mxu0 0
      %1620 = vmatpush1.bf16.msra.mxu0 0
      %1621 = vmatprep.subr.bf16.mxu0 0
      %1622 = vmatpush1.bf16.msra.mxu0 0
      %1623 = vmatprep.subr.bf16.mxu0 %v1594
      %1624 = vmatpush1.bf16.msra.mxu0 %v1593
      %1625 = vmatprep.subr.bf16.mxu0 %v1590
      %1626 = vmatpush1.bf16.msra.mxu0 %v1589
      %1627 = vmatprep.subr.bf16.mxu0 0
      %1628 = vmatpush2.bf16.msra.mxu0 0
      %1629 = vmatprep.subr.bf16.mxu0 0
      %1630 = vmatpush2.bf16.msra.mxu0 0
      %1631 = vmatprep.subr.bf16.mxu0 0
      %1632 = vmatpush2.bf16.msra.mxu0 0
      %1633 = vmatprep.subr.bf16.mxu0 0
      %1634 = vmatpush2.bf16.msra.mxu0 0
      %1635 = vmatprep.subr.bf16.mxu0 0
      %1636 = vmatpush2.bf16.msra.mxu0 0
      %1637 = vmatprep.subr.bf16.mxu0 0
      %1638 = vmatpush2.bf16.msra.mxu0 0
      %1639 = vmatprep.subr.bf16.mxu0 0
      %1640 = vmatpush2.bf16.msra.mxu0 0
      %1641 = vmatprep.subr.bf16.mxu0 0
      %1642 = vmatpush2.bf16.msra.mxu0 0
      %1643 = vmatprep.mubr.bf16.mxu0 0
      %1644 = vmatmul.mubr.bf16.gmra.mxu0 %v1606
      %v1645 = vpop.f32.mrf.mxu0
      %v1646 = vadd.f32 0.0, %v1645
      %v1647 = vpop.f32.mrf.mxu0
      %v1648 = vadd.f32 0.0, %v1647
      %v1649 = vpop.f32.mrf.mxu0
      %v1650 = vadd.f32 0.0, %v1649
      %v1651 = vpop.f32.mrf.mxu0
      %v1652 = vadd.f32 0.0, %v1651
      %1653 = vmatprep.mubr.bf16.mxu0 0
      %1654 = vmatmul.mubr.bf16.gmra.mxu0 %v1609
      %v1655 = vpop.f32.mrf.mxu0
      %v1656 = vadd.f32 0.0, %v1655
      %v1657 = vpop.f32.mrf.mxu0
      %v1658 = vadd.f32 0.0, %v1657
      %v1659 = vpop.f32.mrf.mxu0
      %v1660 = vadd.f32 0.0, %v1659
      %v1661 = vpop.f32.mrf.mxu0
      %v1662 = vadd.f32 0.0, %v1661
      %1663 = vdwg.mxu0
      %1664 = vmatprep.subr.bf16.mxu0 0
      %1665 = vmatpush1.bf16.msra.mxu0 0
      %1666 = vmatprep.subr.bf16.mxu0 0
      %1667 = vmatpush1.bf16.msra.mxu0 0
      %1668 = vmatprep.subr.bf16.mxu0 0
      %1669 = vmatpush1.bf16.msra.mxu0 0
      %1670 = vmatprep.subr.bf16.mxu0 0
      %1671 = vmatpush1.bf16.msra.mxu0 0
      %1672 = vmatprep.subr.bf16.mxu0 0
      %1673 = vmatpush1.bf16.msra.mxu0 0
      %1674 = vmatprep.subr.bf16.mxu0 0
      %1675 = vmatpush1.bf16.msra.mxu0 0
      %1676 = vmatprep.subr.bf16.mxu0 %v1596
      %1677 = vmatpush1.bf16.msra.mxu0 %v1595
      %1678 = vmatprep.subr.bf16.mxu0 %v1592
      %1679 = vmatpush1.bf16.msra.mxu0 %v1591
      %1680 = vmatprep.subr.bf16.mxu0 0
      %1681 = vmatpush2.bf16.msra.mxu0 0
      %1682 = vmatprep.subr.bf16.mxu0 0
      %1683 = vmatpush2.bf16.msra.mxu0 0
      %1684 = vmatprep.subr.bf16.mxu0 0
      %1685 = vmatpush2.bf16.msra.mxu0 0
      %1686 = vmatprep.subr.bf16.mxu0 0
      %1687 = vmatpush2.bf16.msra.mxu0 0
      %1688 = vmatprep.subr.bf16.mxu0 0
      %1689 = vmatpush2.bf16.msra.mxu0 0
      %1690 = vmatprep.subr.bf16.mxu0 0
      %1691 = vmatpush2.bf16.msra.mxu0 0
      %1692 = vmatprep.subr.bf16.mxu0 0
      %1693 = vmatpush2.bf16.msra.mxu0 0
      %1694 = vmatprep.subr.bf16.mxu0 0
      %1695 = vmatpush2.bf16.msra.mxu0 0
      %1696 = vmatprep.mubr.bf16.mxu0 0
      %1697 = vmatmul.mubr.bf16.gmra.mxu0 %v1606
      %v1698 = vpop.f32.mrf.mxu0
      %v1699 = vadd.f32 0.0, %v1698
      %v1700 = vpop.f32.mrf.mxu0
      %v1701 = vadd.f32 0.0, %v1700
      %v1702 = vpop.f32.mrf.mxu0
      %v1703 = vadd.f32 0.0, %v1702
      %v1704 = vpop.f32.mrf.mxu0
      %v1705 = vadd.f32 0.0, %v1704
      %1706 = vmatprep.mubr.bf16.mxu0 0
      %1707 = vmatmul.mubr.bf16.gmra.mxu0 %v1609
      %v1708 = vpop.f32.mrf.mxu0
      %v1709 = vadd.f32 0.0, %v1708
      %v1710 = vpop.f32.mrf.mxu0
      %v1711 = vadd.f32 0.0, %v1710
      %v1712 = vpop.f32.mrf.mxu0
      %v1713 = vadd.f32 0.0, %v1712
      %v1714 = vpop.f32.mrf.mxu0
      %v1715 = vadd.f32 0.0, %v1714
      %1716 = vdwg.mxu0
      %v1717 = vadd.f32 %v1441, %v1646
      %v1718 = vadd.f32 %v1442, %v1648
      %v1719 = vadd.f32 %v1443, %v1699
      %v1720 = vadd.f32 %v1444, %v1701
      %v1721 = vadd.f32 %v1445, %v1650
      %v1722 = vadd.f32 %v1446, %v1652
      %v1723 = vadd.f32 %v1447, %v1703
      %v1724 = vadd.f32 %v1448, %v1705
      %v1725 = vadd.f32 %v1449, %v1656
      %v1726 = vadd.f32 %v1450, %v1658
      %v1727 = vadd.f32 %v1451, %v1709
      %v1728 = vadd.f32 %v1452, %v1711
      %v1729 = vadd.f32 %v1453, %v1660
      %v1730 = vadd.f32 %v1454, %v1662
      %v1731 = vadd.f32 %v1455, %v1713
      %v1732 = vadd.f32 %v1456, %v1715
      %s1733 = scalar_lea.vmem %s4, 6
      %v1734 = vld [vmem:[%s1733] ss:$8 sm:$0xf]
      %v1736 = vlaneseq
      %v1737 = vshrl.u32 %v1736, 7
      %v1738 = vsub.s32 0, %v1737
      %v1739 = vrot.slane %v1734, %v1738
      %v1740 = vlaneseq
      %v1741 = vshrl.u32 %v1740, 7
      %v1742 = vsub.s32 1, %v1741
      %v1743 = vrot.slane %v1734, %v1742
      %v1744 = vlaneseq
      %v1745 = vshrl.u32 %v1744, 7
      %v1746 = vsub.s32 2, %v1745
      %v1747 = vrot.slane %v1734, %v1746
      %v1748 = vlaneseq
      %v1749 = vshrl.u32 %v1748, 7
      %v1750 = vsub.s32 3, %v1749
      %v1751 = vrot.slane %v1734, %v1750
      %1752 = vrot.lane.b32.xlu0 %v1739, 15
      %v1753 = vpop.permute.xlu0 %1752
      %1754 = vrot.lane.b32.xlu0 %v1743, 15
      %v1755 = vpop.permute.xlu0 %1754
      %1756 = vrot.lane.b32.xlu0 %v1747, 15
      %v1757 = vpop.permute.xlu0 %1756
      %1758 = vrot.lane.b32.xlu0 %v1751, 15
      %v1759 = vpop.permute.xlu0 %1758
      %vm1760 = vcmask 121856
      %v1761 = vsel %vm1760, %v1753, %v1755
      %v1762 = vsel %vm1760, %v1755, %v1757
      %v1763 = vsel %vm1760, %v1757, %v1759
      %v1769 = vmul.f32 %v1457, %v1753
      %v1770 = vmul.f32 %v1458, %v1761
      %v1771 = vmul.f32 %v1459, %v1762
      %v1772 = vmul.f32 %v1460, %v1763
      %v1773 = vmul.f32 %v1461, %v1759
      %v1774 = vmul.f32 %v1462, %v1753
      %v1775 = vmul.f32 %v1463, %v1761
      %v1776 = vmul.f32 %v1464, %v1762
      %v1777 = vmul.f32 %v1465, %v1763
      %v1778 = vmul.f32 %v1466, %v1759
      %v1779 = vmul.f32 %v1467, %v1753
      %v1780 = vmul.f32 %v1468, %v1761
      %v1781 = vmul.f32 %v1469, %v1762
      %v1782 = vmul.f32 %v1470, %v1763
      %v1783 = vmul.f32 %v1471, %v1759
      %v1784 = vmul.f32 %v1472, %v1753
      %v1785 = vmul.f32 %v1473, %v1761
      %v1786 = vmul.f32 %v1474, %v1762
      %v1787 = vmul.f32 %v1475, %v1763
      %v1788 = vmul.f32 %v1476, %v1759
      %s1789 = scalar_lea.vmem %s239, 96
      %v1790 = vld [vmem:[%s1789] sm:$0xf]
      %v1791 = vld [vmem:[%s1789 + $0x4] sm:$0xf]
      %v1792 = vld [vmem:[%s1789 + $0x8] sm:$0xf]
      %v1793 = vld [vmem:[%s1789 + $0xc] sm:$0xf]
      %v1794 = vpack.c.bf16 %v1774, %v1769
      %v1795 = vpack.c.bf16 %v1775, %v1770
      %v1796 = vpack.c.bf16 %v1776, %v1771
      %v1797 = vpack.c.bf16 %v1777, %v1772
      %v1798 = vpack.c.bf16 %v1778, %v1773
      %v1799 = vpack.c.bf16 %v1784, %v1779
      %v1800 = vpack.c.bf16 %v1785, %v1780
      %v1801 = vpack.c.bf16 %v1786, %v1781
      %v1802 = vpack.c.bf16 %v1787, %v1782
      %v1803 = vpack.c.bf16 %v1788, %v1783
      %v1808 = vunpack.c.l.b16 %v1790
      %v1809 = vunpack.c.l.b16 %v1791
      %v1810 = vunpack.c.l.b16 %v1792
      %v1811 = vunpack.c.l.b16 %v1793
      %v1812 = vpack.c.b16 %v1809, %v1808
      %v1813 = vpack.c.b16 %v1811, %v1810
      %1824 = vrot.lane.b32.xlu0 %v1794, 113
      %v1825 = vpop.permute.xlu0 %1824
      %1826 = vrot.lane.b32.xlu0 %v1795, 113
      %v1827 = vpop.permute.xlu0 %1826
      %1828 = vrot.lane.b32.xlu0 %v1796, 113
      %v1829 = vpop.permute.xlu0 %1828
      %1830 = vrot.lane.b32.xlu0 %v1797, 113
      %v1831 = vpop.permute.xlu0 %1830
      %1832 = vrot.lane.b32.xlu0 %v1798, 113
      %v1833 = vpop.permute.xlu0 %1832
      %1834 = vrot.lane.b32.xlu0 %v1799, 113
      %v1835 = vpop.permute.xlu0 %1834
      %1836 = vrot.lane.b32.xlu0 %v1800, 113
      %v1837 = vpop.permute.xlu0 %1836
      %1838 = vrot.lane.b32.xlu0 %v1801, 113
      %v1839 = vpop.permute.xlu0 %1838
      %1840 = vrot.lane.b32.xlu0 %v1802, 113
      %v1841 = vpop.permute.xlu0 %1840
      %1842 = vrot.lane.b32.xlu0 %v1803, 113
      %v1843 = vpop.permute.xlu0 %1842
      %vm1844 = vcmask 924672
      %v1845 = vsel %vm1844, %v1825, %v1827
      %v1846 = vsel %vm1844, %v1827, %v1829
      %v1847 = vsel %vm1844, %v1829, %v1831
      %v1848 = vsel %vm1844, %v1831, %v1833
      %v1849 = vsel %vm1844, %v1835, %v1837
      %v1850 = vsel %vm1844, %v1837, %v1839
      %v1851 = vsel %vm1844, %v1839, %v1841
      %v1852 = vsel %vm1844, %v1841, %v1843
      %v1862 = vsel %vm512, %v1812, 0
      %v1865 = vsel %vm512, %v1813, 0
      %1867 = vmatprep.subr.bf16.mxu0 0
      %1868 = vmatpush1.bf16.msra.mxu0 0
      %1869 = vmatprep.subr.bf16.mxu0 0
      %1870 = vmatpush1.bf16.msra.mxu0 0
      %1871 = vmatprep.subr.bf16.mxu0 0
      %1872 = vmatpush1.bf16.msra.mxu0 0
      %1873 = vmatprep.subr.bf16.mxu0 0
      %1874 = vmatpush1.bf16.msra.mxu0 0
      %1875 = vmatprep.subr.bf16.mxu0 0
      %1876 = vmatpush1.bf16.msra.mxu0 0
      %1877 = vmatprep.subr.bf16.mxu0 0
      %1878 = vmatpush1.bf16.msra.mxu0 0
      %1879 = vmatprep.subr.bf16.mxu0 %v1850
      %1880 = vmatpush1.bf16.msra.mxu0 %v1849
      %1881 = vmatprep.subr.bf16.mxu0 %v1846
      %1882 = vmatpush1.bf16.msra.mxu0 %v1845
      %1883 = vmatprep.subr.bf16.mxu0 0
      %1884 = vmatpush2.bf16.msra.mxu0 0
      %1885 = vmatprep.subr.bf16.mxu0 0
      %1886 = vmatpush2.bf16.msra.mxu0 0
      %1887 = vmatprep.subr.bf16.mxu0 0
      %1888 = vmatpush2.bf16.msra.mxu0 0
      %1889 = vmatprep.subr.bf16.mxu0 0
      %1890 = vmatpush2.bf16.msra.mxu0 0
      %1891 = vmatprep.subr.bf16.mxu0 0
      %1892 = vmatpush2.bf16.msra.mxu0 0
      %1893 = vmatprep.subr.bf16.mxu0 0
      %1894 = vmatpush2.bf16.msra.mxu0 0
      %1895 = vmatprep.subr.bf16.mxu0 0
      %1896 = vmatpush2.bf16.msra.mxu0 0
      %1897 = vmatprep.subr.bf16.mxu0 0
      %1898 = vmatpush2.bf16.msra.mxu0 0
      %1899 = vmatprep.mubr.bf16.mxu0 0
      %1900 = vmatmul.mubr.bf16.gmra.mxu0 %v1862
      %v1901 = vpop.f32.mrf.mxu0
      %v1902 = vadd.f32 0.0, %v1901
      %v1903 = vpop.f32.mrf.mxu0
      %v1904 = vadd.f32 0.0, %v1903
      %v1905 = vpop.f32.mrf.mxu0
      %v1906 = vadd.f32 0.0, %v1905
      %v1907 = vpop.f32.mrf.mxu0
      %v1908 = vadd.f32 0.0, %v1907
      %1909 = vmatprep.mubr.bf16.mxu0 0
      %1910 = vmatmul.mubr.bf16.gmra.mxu0 %v1865
      %v1911 = vpop.f32.mrf.mxu0
      %v1912 = vadd.f32 0.0, %v1911
      %v1913 = vpop.f32.mrf.mxu0
      %v1914 = vadd.f32 0.0, %v1913
      %v1915 = vpop.f32.mrf.mxu0
      %v1916 = vadd.f32 0.0, %v1915
      %v1917 = vpop.f32.mrf.mxu0
      %v1918 = vadd.f32 0.0, %v1917
      %1919 = vdwg.mxu0
      %1920 = vmatprep.subr.bf16.mxu0 0
      %1921 = vmatpush1.bf16.msra.mxu0 0
      %1922 = vmatprep.subr.bf16.mxu0 0
      %1923 = vmatpush1.bf16.msra.mxu0 0
      %1924 = vmatprep.subr.bf16.mxu0 0
      %1925 = vmatpush1.bf16.msra.mxu0 0
      %1926 = vmatprep.subr.bf16.mxu0 0
      %1927 = vmatpush1.bf16.msra.mxu0 0
      %1928 = vmatprep.subr.bf16.mxu0 0
      %1929 = vmatpush1.bf16.msra.mxu0 0
      %1930 = vmatprep.subr.bf16.mxu0 0
      %1931 = vmatpush1.bf16.msra.mxu0 0
      %1932 = vmatprep.subr.bf16.mxu0 %v1852
      %1933 = vmatpush1.bf16.msra.mxu0 %v1851
      %1934 = vmatprep.subr.bf16.mxu0 %v1848
      %1935 = vmatpush1.bf16.msra.mxu0 %v1847
      %1936 = vmatprep.subr.bf16.mxu0 0
      %1937 = vmatpush2.bf16.msra.mxu0 0
      %1938 = vmatprep.subr.bf16.mxu0 0
      %1939 = vmatpush2.bf16.msra.mxu0 0
      %1940 = vmatprep.subr.bf16.mxu0 0
      %1941 = vmatpush2.bf16.msra.mxu0 0
      %1942 = vmatprep.subr.bf16.mxu0 0
      %1943 = vmatpush2.bf16.msra.mxu0 0
      %1944 = vmatprep.subr.bf16.mxu0 0
      %1945 = vmatpush2.bf16.msra.mxu0 0
      %1946 = vmatprep.subr.bf16.mxu0 0
      %1947 = vmatpush2.bf16.msra.mxu0 0
      %1948 = vmatprep.subr.bf16.mxu0 0
      %1949 = vmatpush2.bf16.msra.mxu0 0
      %1950 = vmatprep.subr.bf16.mxu0 0
      %1951 = vmatpush2.bf16.msra.mxu0 0
      %1952 = vmatprep.mubr.bf16.mxu0 0
      %1953 = vmatmul.mubr.bf16.gmra.mxu0 %v1862
      %v1954 = vpop.f32.mrf.mxu0
      %v1955 = vadd.f32 0.0, %v1954
      %v1956 = vpop.f32.mrf.mxu0
      %v1957 = vadd.f32 0.0, %v1956
      %v1958 = vpop.f32.mrf.mxu0
      %v1959 = vadd.f32 0.0, %v1958
      %v1960 = vpop.f32.mrf.mxu0
      %v1961 = vadd.f32 0.0, %v1960
      %1962 = vmatprep.mubr.bf16.mxu0 0
      %1963 = vmatmul.mubr.bf16.gmra.mxu0 %v1865
      %v1964 = vpop.f32.mrf.mxu0
      %v1965 = vadd.f32 0.0, %v1964
      %v1966 = vpop.f32.mrf.mxu0
      %v1967 = vadd.f32 0.0, %v1966
      %v1968 = vpop.f32.mrf.mxu0
      %v1969 = vadd.f32 0.0, %v1968
      %v1970 = vpop.f32.mrf.mxu0
      %v1971 = vadd.f32 0.0, %v1970
      %1972 = vdwg.mxu0
      %v1973 = vadd.f32 %v1717, %v1902
      %v1974 = vadd.f32 %v1718, %v1904
      %v1975 = vadd.f32 %v1719, %v1955
      %v1976 = vadd.f32 %v1720, %v1957
      %v1977 = vadd.f32 %v1721, %v1906
      %v1978 = vadd.f32 %v1722, %v1908
      %v1979 = vadd.f32 %v1723, %v1959
      %v1980 = vadd.f32 %v1724, %v1961
      %v1981 = vadd.f32 %v1725, %v1912
      %v1982 = vadd.f32 %v1726, %v1914
      %v1983 = vadd.f32 %v1727, %v1965
      %v1984 = vadd.f32 %v1728, %v1967
      %v1985 = vadd.f32 %v1729, %v1916
      %v1986 = vadd.f32 %v1730, %v1918
      %v1987 = vadd.f32 %v1731, %v1969
      %v1988 = vadd.f32 %v1732, %v1971
      %s1989 = scalar_lea.vmem %s4, 7
      %v1990 = vld [vmem:[%s1989] ss:$8 sm:$0xf]
      %v1992 = vlaneseq
      %v1993 = vshrl.u32 %v1992, 7
      %v1994 = vsub.s32 0, %v1993
      %v1995 = vrot.slane %v1990, %v1994
      %v1996 = vlaneseq
      %v1997 = vshrl.u32 %v1996, 7
      %v1998 = vsub.s32 1, %v1997
      %v1999 = vrot.slane %v1990, %v1998
      %v2000 = vlaneseq
      %v2001 = vshrl.u32 %v2000, 7
      %v2002 = vsub.s32 2, %v2001
      %v2003 = vrot.slane %v1990, %v2002
      %v2004 = vlaneseq
      %v2005 = vshrl.u32 %v2004, 7
      %v2006 = vsub.s32 3, %v2005
      %v2007 = vrot.slane %v1990, %v2006
      %2008 = vrot.lane.b32.xlu0 %v1995, 16
      %v2009 = vpop.permute.xlu0 %2008
      %2010 = vrot.lane.b32.xlu0 %v1999, 16
      %v2011 = vpop.permute.xlu0 %2010
      %2012 = vrot.lane.b32.xlu0 %v2003, 16
      %v2013 = vpop.permute.xlu0 %2012
      %2014 = vrot.lane.b32.xlu0 %v2007, 16
      %v2015 = vpop.permute.xlu0 %2014
      %vm2016 = vcmask 130048
      %v2017 = vsel %vm2016, %v2009, %v2011
      %v2018 = vsel %vm2016, %v2011, %v2013
      %v2019 = vsel %vm2016, %v2013, %v2015
      %v2025 = vmul.f32 %v1457, %v2009
      %v2026 = vmul.f32 %v1458, %v2017
      %v2027 = vmul.f32 %v1459, %v2018
      %v2028 = vmul.f32 %v1460, %v2019
      %v2029 = vmul.f32 %v1461, %v2015
      %v2030 = vmul.f32 %v1462, %v2009
      %v2031 = vmul.f32 %v1463, %v2017
      %v2032 = vmul.f32 %v1464, %v2018
      %v2033 = vmul.f32 %v1465, %v2019
      %v2034 = vmul.f32 %v1466, %v2015
      %v2035 = vmul.f32 %v1467, %v2009
      %v2036 = vmul.f32 %v1468, %v2017
      %v2037 = vmul.f32 %v1469, %v2018
      %v2038 = vmul.f32 %v1470, %v2019
      %v2039 = vmul.f32 %v1471, %v2015
      %v2040 = vmul.f32 %v1472, %v2009
      %v2041 = vmul.f32 %v1473, %v2017
      %v2042 = vmul.f32 %v1474, %v2018
      %v2043 = vmul.f32 %v1475, %v2019
      %v2044 = vmul.f32 %v1476, %v2015
      %s2045 = scalar_lea.vmem %s239, 112
      %v2046 = vld [vmem:[%s2045] sm:$0xf]
      %v2047 = vld [vmem:[%s2045 + $0x4] sm:$0xf]
      %v2048 = vld [vmem:[%s2045 + $0x8] sm:$0xf]
      %v2049 = vld [vmem:[%s2045 + $0xc] sm:$0xf]
      %v2050 = vpack.c.bf16 %v2030, %v2025
      %v2051 = vpack.c.bf16 %v2031, %v2026
      %v2052 = vpack.c.bf16 %v2032, %v2027
      %v2053 = vpack.c.bf16 %v2033, %v2028
      %v2054 = vpack.c.bf16 %v2034, %v2029
      %v2055 = vpack.c.bf16 %v2040, %v2035
      %v2056 = vpack.c.bf16 %v2041, %v2036
      %v2057 = vpack.c.bf16 %v2042, %v2037
      %v2058 = vpack.c.bf16 %v2043, %v2038
      %v2059 = vpack.c.bf16 %v2044, %v2039
      %v2064 = vunpack.c.l.b16 %v2046
      %v2065 = vunpack.c.l.b16 %v2047
      %v2066 = vunpack.c.l.b16 %v2048
      %v2067 = vunpack.c.l.b16 %v2049
      %v2068 = vpack.c.b16 %v2065, %v2064
      %v2069 = vpack.c.b16 %v2067, %v2066
      %2080 = vrot.lane.b32.xlu0 %v2050, 112
      %v2081 = vpop.permute.xlu0 %2080
      %2082 = vrot.lane.b32.xlu0 %v2051, 112
      %v2083 = vpop.permute.xlu0 %2082
      %2084 = vrot.lane.b32.xlu0 %v2052, 112
      %v2085 = vpop.permute.xlu0 %2084
      %2086 = vrot.lane.b32.xlu0 %v2053, 112
      %v2087 = vpop.permute.xlu0 %2086
      %2088 = vrot.lane.b32.xlu0 %v2054, 112
      %v2089 = vpop.permute.xlu0 %2088
      %2090 = vrot.lane.b32.xlu0 %v2055, 112
      %v2091 = vpop.permute.xlu0 %2090
      %2092 = vrot.lane.b32.xlu0 %v2056, 112
      %v2093 = vpop.permute.xlu0 %2092
      %2094 = vrot.lane.b32.xlu0 %v2057, 112
      %v2095 = vpop.permute.xlu0 %2094
      %2096 = vrot.lane.b32.xlu0 %v2058, 112
      %v2097 = vpop.permute.xlu0 %2096
      %2098 = vrot.lane.b32.xlu0 %v2059, 112
      %v2099 = vpop.permute.xlu0 %2098
      %vm2100 = vcmask 916480
      %v2101 = vsel %vm2100, %v2081, %v2083
      %v2102 = vsel %vm2100, %v2083, %v2085
      %v2103 = vsel %vm2100, %v2085, %v2087
      %v2104 = vsel %vm2100, %v2087, %v2089
      %v2105 = vsel %vm2100, %v2091, %v2093
      %v2106 = vsel %vm2100, %v2093, %v2095
      %v2107 = vsel %vm2100, %v2095, %v2097
      %v2108 = vsel %vm2100, %v2097, %v2099
      %v2118 = vsel %vm512, %v2068, 0
      %v2121 = vsel %vm512, %v2069, 0
      %2123 = vmatprep.subr.bf16.mxu0 0
      %2124 = vmatpush1.bf16.msra.mxu0 0
      %2125 = vmatprep.subr.bf16.mxu0 0
      %2126 = vmatpush1.bf16.msra.mxu0 0
      %2127 = vmatprep.subr.bf16.mxu0 0
      %2128 = vmatpush1.bf16.msra.mxu0 0
      %2129 = vmatprep.subr.bf16.mxu0 0
      %2130 = vmatpush1.bf16.msra.mxu0 0
      %2131 = vmatprep.subr.bf16.mxu0 0
      %2132 = vmatpush1.bf16.msra.mxu0 0
      %2133 = vmatprep.subr.bf16.mxu0 0
      %2134 = vmatpush1.bf16.msra.mxu0 0
      %2135 = vmatprep.subr.bf16.mxu0 %v2106
      %2136 = vmatpush1.bf16.msra.mxu0 %v2105
      %2137 = vmatprep.subr.bf16.mxu0 %v2102
      %2138 = vmatpush1.bf16.msra.mxu0 %v2101
      %2139 = vmatprep.subr.bf16.mxu0 0
      %2140 = vmatpush2.bf16.msra.mxu0 0
      %2141 = vmatprep.subr.bf16.mxu0 0
      %2142 = vmatpush2.bf16.msra.mxu0 0
      %2143 = vmatprep.subr.bf16.mxu0 0
      %2144 = vmatpush2.bf16.msra.mxu0 0
      %2145 = vmatprep.subr.bf16.mxu0 0
      %2146 = vmatpush2.bf16.msra.mxu0 0
      %2147 = vmatprep.subr.bf16.mxu0 0
      %2148 = vmatpush2.bf16.msra.mxu0 0
      %2149 = vmatprep.subr.bf16.mxu0 0
      %2150 = vmatpush2.bf16.msra.mxu0 0
      %2151 = vmatprep.subr.bf16.mxu0 0
      %2152 = vmatpush2.bf16.msra.mxu0 0
      %2153 = vmatprep.subr.bf16.mxu0 0
      %2154 = vmatpush2.bf16.msra.mxu0 0
      %2155 = vmatprep.mubr.bf16.mxu0 0
      %2156 = vmatmul.mubr.bf16.gmra.mxu0 %v2118
      %v2157 = vpop.f32.mrf.mxu0
      %v2158 = vadd.f32 0.0, %v2157
      %v2159 = vpop.f32.mrf.mxu0
      %v2160 = vadd.f32 0.0, %v2159
      %v2161 = vpop.f32.mrf.mxu0
      %v2162 = vadd.f32 0.0, %v2161
      %v2163 = vpop.f32.mrf.mxu0
      %v2164 = vadd.f32 0.0, %v2163
      %2165 = vmatprep.mubr.bf16.mxu0 0
      %2166 = vmatmul.mubr.bf16.gmra.mxu0 %v2121
      %v2167 = vpop.f32.mrf.mxu0
      %v2168 = vadd.f32 0.0, %v2167
      %v2169 = vpop.f32.mrf.mxu0
      %v2170 = vadd.f32 0.0, %v2169
      %v2171 = vpop.f32.mrf.mxu0
      %v2172 = vadd.f32 0.0, %v2171
      %v2173 = vpop.f32.mrf.mxu0
      %v2174 = vadd.f32 0.0, %v2173
      %2175 = vdwg.mxu0
      %2176 = vmatprep.subr.bf16.mxu0 0
      %2177 = vmatpush1.bf16.msra.mxu0 0
      %2178 = vmatprep.subr.bf16.mxu0 0
      %2179 = vmatpush1.bf16.msra.mxu0 0
      %2180 = vmatprep.subr.bf16.mxu0 0
      %2181 = vmatpush1.bf16.msra.mxu0 0
      %2182 = vmatprep.subr.bf16.mxu0 0
      %2183 = vmatpush1.bf16.msra.mxu0 0
      %2184 = vmatprep.subr.bf16.mxu0 0
      %2185 = vmatpush1.bf16.msra.mxu0 0
      %2186 = vmatprep.subr.bf16.mxu0 0
      %2187 = vmatpush1.bf16.msra.mxu0 0
      %2188 = vmatprep.subr.bf16.mxu0 %v2108
      %2189 = vmatpush1.bf16.msra.mxu0 %v2107
      %2190 = vmatprep.subr.bf16.mxu0 %v2104
      %2191 = vmatpush1.bf16.msra.mxu0 %v2103
      %2192 = vmatprep.subr.bf16.mxu0 0
      %2193 = vmatpush2.bf16.msra.mxu0 0
      %2194 = vmatprep.subr.bf16.mxu0 0
      %2195 = vmatpush2.bf16.msra.mxu0 0
      %2196 = vmatprep.subr.bf16.mxu0 0
      %2197 = vmatpush2.bf16.msra.mxu0 0
      %2198 = vmatprep.subr.bf16.mxu0 0
      %2199 = vmatpush2.bf16.msra.mxu0 0
      %2200 = vmatprep.subr.bf16.mxu0 0
      %2201 = vmatpush2.bf16.msra.mxu0 0
      %2202 = vmatprep.subr.bf16.mxu0 0
      %2203 = vmatpush2.bf16.msra.mxu0 0
      %2204 = vmatprep.subr.bf16.mxu0 0
      %2205 = vmatpush2.bf16.msra.mxu0 0
      %2206 = vmatprep.subr.bf16.mxu0 0
      %2207 = vmatpush2.bf16.msra.mxu0 0
      %2208 = vmatprep.mubr.bf16.mxu0 0
      %2209 = vmatmul.mubr.bf16.gmra.mxu0 %v2118
      %v2210 = vpop.f32.mrf.mxu0
      %v2211 = vadd.f32 0.0, %v2210
      %v2212 = vpop.f32.mrf.mxu0
      %v2213 = vadd.f32 0.0, %v2212
      %v2214 = vpop.f32.mrf.mxu0
      %v2215 = vadd.f32 0.0, %v2214
      %v2216 = vpop.f32.mrf.mxu0
      %v2217 = vadd.f32 0.0, %v2216
      %2218 = vmatprep.mubr.bf16.mxu0 0
      %2219 = vmatmul.mubr.bf16.gmra.mxu0 %v2121
      %v2220 = vpop.f32.mrf.mxu0
      %v2221 = vadd.f32 0.0, %v2220
      %v2222 = vpop.f32.mrf.mxu0
      %v2223 = vadd.f32 0.0, %v2222
      %v2224 = vpop.f32.mrf.mxu0
      %v2225 = vadd.f32 0.0, %v2224
      %v2226 = vpop.f32.mrf.mxu0
      %v2227 = vadd.f32 0.0, %v2226
      %2228 = vdwg.mxu0
      %v2229 = vadd.f32 %v1973, %v2158
      %v2230 = vadd.f32 %v1974, %v2160
      %v2231 = vadd.f32 %v1975, %v2211
      %v2232 = vadd.f32 %v1976, %v2213
      %v2233 = vadd.f32 %v1977, %v2162
      %v2234 = vadd.f32 %v1978, %v2164
      %v2235 = vadd.f32 %v1979, %v2215
      %v2236 = vadd.f32 %v1980, %v2217
      %v2237 = vadd.f32 %v1981, %v2168
      %v2238 = vadd.f32 %v1982, %v2170
      %v2239 = vadd.f32 %v1983, %v2221
      %v2240 = vadd.f32 %v1984, %v2223
      %v2241 = vadd.f32 %v1985, %v2172
      %v2242 = vadd.f32 %v1986, %v2174
      %v2243 = vadd.f32 %v1987, %v2225
      %v2244 = vadd.f32 %v1988, %v2227
      %s2245 = scalar_lea.vmem %s4, 32
      %v2246 = vld [vmem:[%s2245] ss:$8 sm:$0xf]
      %v2248 = vlaneseq
      %v2249 = vshrl.u32 %v2248, 7
      %v2250 = vsub.s32 0, %v2249
      %v2251 = vrot.slane %v2246, %v2250
      %v2252 = vlaneseq
      %v2253 = vshrl.u32 %v2252, 7
      %v2254 = vsub.s32 1, %v2253
      %v2255 = vrot.slane %v2246, %v2254
      %v2256 = vlaneseq
      %v2257 = vshrl.u32 %v2256, 7
      %v2258 = vsub.s32 2, %v2257
      %v2259 = vrot.slane %v2246, %v2258
      %v2260 = vlaneseq
      %v2261 = vshrl.u32 %v2260, 7
      %v2262 = vsub.s32 3, %v2261
      %v2263 = vrot.slane %v2246, %v2262
      %2264 = vrot.lane.b32.xlu0 %v2251, 17
      %v2265 = vpop.permute.xlu0 %2264
      %2266 = vrot.lane.b32.xlu0 %v2255, 17
      %v2267 = vpop.permute.xlu0 %2266
      %2268 = vrot.lane.b32.xlu0 %v2259, 17
      %v2269 = vpop.permute.xlu0 %2268
      %2270 = vrot.lane.b32.xlu0 %v2263, 17
      %v2271 = vpop.permute.xlu0 %2270
      %vm2272 = vcmask 138240
      %v2273 = vsel %vm2272, %v2265, %v2267
      %v2274 = vsel %vm2272, %v2267, %v2269
      %v2275 = vsel %vm2272, %v2269, %v2271
      %v2281 = vmul.f32 %v1457, %v2265
      %v2282 = vmul.f32 %v1458, %v2273
      %v2283 = vmul.f32 %v1459, %v2274
      %v2284 = vmul.f32 %v1460, %v2275
      %v2285 = vmul.f32 %v1461, %v2271
      %v2286 = vmul.f32 %v1462, %v2265
      %v2287 = vmul.f32 %v1463, %v2273
      %v2288 = vmul.f32 %v1464, %v2274
      %v2289 = vmul.f32 %v1465, %v2275
      %v2290 = vmul.f32 %v1466, %v2271
      %v2291 = vmul.f32 %v1467, %v2265
      %v2292 = vmul.f32 %v1468, %v2273
      %v2293 = vmul.f32 %v1469, %v2274
      %v2294 = vmul.f32 %v1470, %v2275
      %v2295 = vmul.f32 %v1471, %v2271
      %v2296 = vmul.f32 %v1472, %v2265
      %v2297 = vmul.f32 %v1473, %v2273
      %v2298 = vmul.f32 %v1474, %v2274
      %v2299 = vmul.f32 %v1475, %v2275
      %v2300 = vmul.f32 %v1476, %v2271
      %s2301 = scalar_lea.vmem %s239, 128
      %v2302 = vld [vmem:[%s2301] sm:$0xf]
      %v2303 = vld [vmem:[%s2301 + $0x4] sm:$0xf]
      %v2304 = vld [vmem:[%s2301 + $0x8] sm:$0xf]
      %v2305 = vld [vmem:[%s2301 + $0xc] sm:$0xf]
      %v2306 = vpack.c.bf16 %v2286, %v2281
      %v2307 = vpack.c.bf16 %v2287, %v2282
      %v2308 = vpack.c.bf16 %v2288, %v2283
      %v2309 = vpack.c.bf16 %v2289, %v2284
      %v2310 = vpack.c.bf16 %v2290, %v2285
      %v2311 = vpack.c.bf16 %v2296, %v2291
      %v2312 = vpack.c.bf16 %v2297, %v2292
      %v2313 = vpack.c.bf16 %v2298, %v2293
      %v2314 = vpack.c.bf16 %v2299, %v2294
      %v2315 = vpack.c.bf16 %v2300, %v2295
      %v2320 = vunpack.c.l.b16 %v2302
      %v2321 = vunpack.c.l.b16 %v2303
      %v2322 = vunpack.c.l.b16 %v2304
      %v2323 = vunpack.c.l.b16 %v2305
      %v2324 = vpack.c.b16 %v2321, %v2320
      %v2325 = vpack.c.b16 %v2323, %v2322
      %2336 = vrot.lane.b32.xlu0 %v2306, 111
      %v2337 = vpop.permute.xlu0 %2336
      %2338 = vrot.lane.b32.xlu0 %v2307, 111
      %v2339 = vpop.permute.xlu0 %2338
      %2340 = vrot.lane.b32.xlu0 %v2308, 111
      %v2341 = vpop.permute.xlu0 %2340
      %2342 = vrot.lane.b32.xlu0 %v2309, 111
      %v2343 = vpop.permute.xlu0 %2342
      %2344 = vrot.lane.b32.xlu0 %v2310, 111
      %v2345 = vpop.permute.xlu0 %2344
      %2346 = vrot.lane.b32.xlu0 %v2311, 111
      %v2347 = vpop.permute.xlu0 %2346
      %2348 = vrot.lane.b32.xlu0 %v2312, 111
      %v2349 = vpop.permute.xlu0 %2348
      %2350 = vrot.lane.b32.xlu0 %v2313, 111
      %v2351 = vpop.permute.xlu0 %2350
      %2352 = vrot.lane.b32.xlu0 %v2314, 111
      %v2353 = vpop.permute.xlu0 %2352
      %2354 = vrot.lane.b32.xlu0 %v2315, 111
      %v2355 = vpop.permute.xlu0 %2354
      %vm2356 = vcmask 908288
      %v2357 = vsel %vm2356, %v2337, %v2339
      %v2358 = vsel %vm2356, %v2339, %v2341
      %v2359 = vsel %vm2356, %v2341, %v2343
      %v2360 = vsel %vm2356, %v2343, %v2345
      %v2361 = vsel %vm2356, %v2347, %v2349
      %v2362 = vsel %vm2356, %v2349, %v2351
      %v2363 = vsel %vm2356, %v2351, %v2353
      %v2364 = vsel %vm2356, %v2353, %v2355
      %v2374 = vsel %vm512, %v2324, 0
      %v2377 = vsel %vm512, %v2325, 0
      %2379 = vmatprep.subr.bf16.mxu0 0
      %2380 = vmatpush1.bf16.msra.mxu0 0
      %2381 = vmatprep.subr.bf16.mxu0 0
      %2382 = vmatpush1.bf16.msra.mxu0 0
      %2383 = vmatprep.subr.bf16.mxu0 0
      %2384 = vmatpush1.bf16.msra.mxu0 0
      %2385 = vmatprep.subr.bf16.mxu0 0
      %2386 = vmatpush1.bf16.msra.mxu0 0
      %2387 = vmatprep.subr.bf16.mxu0 0
      %2388 = vmatpush1.bf16.msra.mxu0 0
      %2389 = vmatprep.subr.bf16.mxu0 0
      %2390 = vmatpush1.bf16.msra.mxu0 0
      %2391 = vmatprep.subr.bf16.mxu0 %v2362
      %2392 = vmatpush1.bf16.msra.mxu0 %v2361
      %2393 = vmatprep.subr.bf16.mxu0 %v2358
      %2394 = vmatpush1.bf16.msra.mxu0 %v2357
      %2395 = vmatprep.subr.bf16.mxu0 0
      %2396 = vmatpush2.bf16.msra.mxu0 0
      %2397 = vmatprep.subr.bf16.mxu0 0
      %2398 = vmatpush2.bf16.msra.mxu0 0
      %2399 = vmatprep.subr.bf16.mxu0 0
      %2400 = vmatpush2.bf16.msra.mxu0 0
      %2401 = vmatprep.subr.bf16.mxu0 0
      %2402 = vmatpush2.bf16.msra.mxu0 0
      %2403 = vmatprep.subr.bf16.mxu0 0
      %2404 = vmatpush2.bf16.msra.mxu0 0
      %2405 = vmatprep.subr.bf16.mxu0 0
      %2406 = vmatpush2.bf16.msra.mxu0 0
      %2407 = vmatprep.subr.bf16.mxu0 0
      %2408 = vmatpush2.bf16.msra.mxu0 0
      %2409 = vmatprep.subr.bf16.mxu0 0
      %2410 = vmatpush2.bf16.msra.mxu0 0
      %2411 = vmatprep.mubr.bf16.mxu0 0
      %2412 = vmatmul.mubr.bf16.gmra.mxu0 %v2374
      %v2413 = vpop.f32.mrf.mxu0
      %v2414 = vadd.f32 0.0, %v2413
      %v2415 = vpop.f32.mrf.mxu0
      %v2416 = vadd.f32 0.0, %v2415
      %v2417 = vpop.f32.mrf.mxu0
      %v2418 = vadd.f32 0.0, %v2417
      %v2419 = vpop.f32.mrf.mxu0
      %v2420 = vadd.f32 0.0, %v2419
      %2421 = vmatprep.mubr.bf16.mxu0 0
      %2422 = vmatmul.mubr.bf16.gmra.mxu0 %v2377
      %v2423 = vpop.f32.mrf.mxu0
      %v2424 = vadd.f32 0.0, %v2423
      %v2425 = vpop.f32.mrf.mxu0
      %v2426 = vadd.f32 0.0, %v2425
      %v2427 = vpop.f32.mrf.mxu0
      %v2428 = vadd.f32 0.0, %v2427
      %v2429 = vpop.f32.mrf.mxu0
      %v2430 = vadd.f32 0.0, %v2429
      %2431 = vdwg.mxu0
      %2432 = vmatprep.subr.bf16.mxu0 0
      %2433 = vmatpush1.bf16.msra.mxu0 0
      %2434 = vmatprep.subr.bf16.mxu0 0
      %2435 = vmatpush1.bf16.msra.mxu0 0
      %2436 = vmatprep.subr.bf16.mxu0 0
      %2437 = vmatpush1.bf16.msra.mxu0 0
      %2438 = vmatprep.subr.bf16.mxu0 0
      %2439 = vmatpush1.bf16.msra.mxu0 0
      %2440 = vmatprep.subr.bf16.mxu0 0
      %2441 = vmatpush1.bf16.msra.mxu0 0
      %2442 = vmatprep.subr.bf16.mxu0 0
      %2443 = vmatpush1.bf16.msra.mxu0 0
      %2444 = vmatprep.subr.bf16.mxu0 %v2364
      %2445 = vmatpush1.bf16.msra.mxu0 %v2363
      %2446 = vmatprep.subr.bf16.mxu0 %v2360
      %2447 = vmatpush1.bf16.msra.mxu0 %v2359
      %2448 = vmatprep.subr.bf16.mxu0 0
      %2449 = vmatpush2.bf16.msra.mxu0 0
      %2450 = vmatprep.subr.bf16.mxu0 0
      %2451 = vmatpush2.bf16.msra.mxu0 0
      %2452 = vmatprep.subr.bf16.mxu0 0
      %2453 = vmatpush2.bf16.msra.mxu0 0
      %2454 = vmatprep.subr.bf16.mxu0 0
      %2455 = vmatpush2.bf16.msra.mxu0 0
      %2456 = vmatprep.subr.bf16.mxu0 0
      %2457 = vmatpush2.bf16.msra.mxu0 0
      %2458 = vmatprep.subr.bf16.mxu0 0
      %2459 = vmatpush2.bf16.msra.mxu0 0
      %2460 = vmatprep.subr.bf16.mxu0 0
      %2461 = vmatpush2.bf16.msra.mxu0 0
      %2462 = vmatprep.subr.bf16.mxu0 0
      %2463 = vmatpush2.bf16.msra.mxu0 0
      %2464 = vmatprep.mubr.bf16.mxu0 0
      %2465 = vmatmul.mubr.bf16.gmra.mxu0 %v2374
      %v2466 = vpop.f32.mrf.mxu0
      %v2467 = vadd.f32 0.0, %v2466
      %v2468 = vpop.f32.mrf.mxu0
      %v2469 = vadd.f32 0.0, %v2468
      %v2470 = vpop.f32.mrf.mxu0
      %v2471 = vadd.f32 0.0, %v2470
      %v2472 = vpop.f32.mrf.mxu0
      %v2473 = vadd.f32 0.0, %v2472
      %2474 = vmatprep.mubr.bf16.mxu0 0
      %2475 = vmatmul.mubr.bf16.gmra.mxu0 %v2377
      %v2476 = vpop.f32.mrf.mxu0
      %v2477 = vadd.f32 0.0, %v2476
      %v2478 = vpop.f32.mrf.mxu0
      %v2479 = vadd.f32 0.0, %v2478
      %v2480 = vpop.f32.mrf.mxu0
      %v2481 = vadd.f32 0.0, %v2480
      %v2482 = vpop.f32.mrf.mxu0
      %v2483 = vadd.f32 0.0, %v2482
      %2484 = vdwg.mxu0
      %v2485 = vadd.f32 %v2229, %v2414
      %v2486 = vadd.f32 %v2230, %v2416
      %v2487 = vadd.f32 %v2231, %v2467
      %v2488 = vadd.f32 %v2232, %v2469
      %v2489 = vadd.f32 %v2233, %v2418
      %v2490 = vadd.f32 %v2234, %v2420
      %v2491 = vadd.f32 %v2235, %v2471
      %v2492 = vadd.f32 %v2236, %v2473
      %v2493 = vadd.f32 %v2237, %v2424
      %v2494 = vadd.f32 %v2238, %v2426
      %v2495 = vadd.f32 %v2239, %v2477
      %v2496 = vadd.f32 %v2240, %v2479
      %v2497 = vadd.f32 %v2241, %v2428
      %v2498 = vadd.f32 %v2242, %v2430
      %v2499 = vadd.f32 %v2243, %v2481
      %v2500 = vadd.f32 %v2244, %v2483
      %p2501 = scmp.ne.s32.totalorder %s16, 4
      // Predicated region
      $region45: #{feature_network_cnn.1} parent=39 // pred_check
        %p2502 = pneg %p2501
      $region46: #{feature_network_cnn.1} parent=39 // pred_check_branch
        %2504 = sbr.rel (%p2502) target = $region48
      $region47: #{feature_network_cnn.1} parent=39 // pred_region
        %v2505 = vadd.f32 %v2485, %v2486
        %v2506 = vadd.f32 %v2505, %v2487
        %v2507 = vadd.f32 %v2506, %v2488
        %2508 = vadd.xlane.f32.xlu0 %v2507
        %v2509 = vpop.xlane.xlu0 %2508
        %v2510 = vadd.f32 %v2489, %v2490
        %v2511 = vadd.f32 %v2510, %v2491
        %v2512 = vadd.f32 %v2511, %v2492
        %2513 = vadd.xlane.f32.xlu0 %v2512
        %v2514 = vpop.xlane.xlu0 %2513
        %v2515 = vadd.f32 %v2493, %v2494
        %v2516 = vadd.f32 %v2515, %v2495
        %v2517 = vadd.f32 %v2516, %v2496
        %2518 = vadd.xlane.f32.xlu0 %v2517
        %v2519 = vpop.xlane.xlu0 %2518
        %v2520 = vadd.f32 %v2497, %v2498
        %v2521 = vadd.f32 %v2520, %v2499
        %v2522 = vadd.f32 %v2521, %v2500
        %2523 = vadd.xlane.f32.xlu0 %v2522
        %v2524 = vpop.xlane.xlu0 %2523
        %v2525 = vmul.f32 %v2485, %v2485
        %v2526 = vmul.f32 %v2486, %v2486
        %v2527 = vmul.f32 %v2487, %v2487
        %v2528 = vmul.f32 %v2488, %v2488
        %v2529 = vmul.f32 %v2489, %v2489
        %v2530 = vmul.f32 %v2490, %v2490
        %v2531 = vmul.f32 %v2491, %v2491
        %v2532 = vmul.f32 %v2492, %v2492
        %v2533 = vmul.f32 %v2493, %v2493
        %v2534 = vmul.f32 %v2494, %v2494
        %v2535 = vmul.f32 %v2495, %v2495
        %v2536 = vmul.f32 %v2496, %v2496
        %v2537 = vmul.f32 %v2497, %v2497
        %v2538 = vmul.f32 %v2498, %v2498
        %v2539 = vmul.f32 %v2499, %v2499
        %v2540 = vmul.f32 %v2500, %v2500
        %v2541 = vadd.f32 %v2525, %v2526
        %v2542 = vadd.f32 %v2541, %v2527
        %v2543 = vadd.f32 %v2542, %v2528
        %2544 = vadd.xlane.f32.xlu0 %v2543
        %v2545 = vpop.xlane.xlu0 %2544
        %v2546 = vadd.f32 %v2529, %v2530
        %v2547 = vadd.f32 %v2546, %v2531
        %v2548 = vadd.f32 %v2547, %v2532
        %2549 = vadd.xlane.f32.xlu0 %v2548
        %v2550 = vpop.xlane.xlu0 %2549
        %v2551 = vadd.f32 %v2533, %v2534
        %v2552 = vadd.f32 %v2551, %v2535
        %v2553 = vadd.f32 %v2552, %v2536
        %2554 = vadd.xlane.f32.xlu0 %v2553
        %v2555 = vpop.xlane.xlu0 %2554
        %v2556 = vadd.f32 %v2537, %v2538
        %v2557 = vadd.f32 %v2556, %v2539
        %v2558 = vadd.f32 %v2557, %v2540
        %2559 = vadd.xlane.f32.xlu0 %v2558
        %v2560 = vpop.xlane.xlu0 %2559
        %v2561 = vmul.f32 %v2509, 0.001953125
        %v2562 = vmul.f32 %v2514, 0.001953125
        %v2563 = vmul.f32 %v2519, 0.001953125
        %v2564 = vmul.f32 %v2524, 0.001953125
        %v2565 = vmul.f32 %v2545, 0.001953125
        %v2566 = vmul.f32 %v2550, 0.001953125
        %v2567 = vmul.f32 %v2555, 0.001953125
        %v2568 = vmul.f32 %v2560, 0.001953125
        %v2569 = vmul.f32 %v2561, %v2561
        %v2570 = vmul.f32 %v2562, %v2562
        %v2571 = vmul.f32 %v2563, %v2563
        %v2572 = vmul.f32 %v2564, %v2564
        %v2573 = vsub.f32 %v2565, %v2569
        %v2574 = vsub.f32 %v2566, %v2570
        %v2575 = vsub.f32 %v2567, %v2571
        %v2576 = vsub.f32 %v2568, %v2572
        %v2577 = vadd.f32 %v2573, 1e-05
        %v2578 = vadd.f32 %v2574, 1e-05
        %v2579 = vadd.f32 %v2575, 1e-05
        %v2580 = vadd.f32 %v2576, 1e-05
        %v2581 = vrsqrt.pop %v2577
        %v2582 = vrsqrt.pop %v2578
        %v2583 = vrsqrt.pop %v2579
        %v2584 = vrsqrt.pop %v2580
        %v2585 = vld [vmem:[%s244] sm:$0xff]
        %v2586 = vld [vmem:[%s244 + $0x8] sm:$0xff]
        %v2587 = vld [vmem:[%s244 + $0x10] sm:$0xff]
        %v2588 = vld [vmem:[%s244 + $0x18] sm:$0xff]
        %v2589 = vmul.f32 %v2581, %v2585
        %v2590 = vmul.f32 %v2582, %v2586
        %v2591 = vmul.f32 %v2583, %v2587
        %v2592 = vmul.f32 %v2584, %v2588
        %v2593 = vld [vmem:[%s249] sm:$0xff]
        %v2594 = vld [vmem:[%s249 + $0x8] sm:$0xff]
        %v2595 = vld [vmem:[%s249 + $0x10] sm:$0xff]
        %v2596 = vld [vmem:[%s249 + $0x18] sm:$0xff]
        %v2597 = vmul.f32 %v2561, %v2589
        %v2598 = vmul.f32 %v2562, %v2590
        %v2599 = vmul.f32 %v2563, %v2591
        %v2600 = vmul.f32 %v2564, %v2592
        %v2601 = vsub.f32 %v2593, %v2597
        %v2602 = vsub.f32 %v2594, %v2598
        %v2603 = vsub.f32 %v2595, %v2599
        %v2604 = vsub.f32 %v2596, %v2600
        %2606 = vset.pattern.permute.xlu0 0
        %2607 = vperm.xlu0 %2606, %v2589
        %v2608 = vpop.permute.xlu0 %2607
        %2611 = vset.pattern.permute.xlu0 0
        %2612 = vperm.xlu0 %2611, %v2590
        %v2613 = vpop.permute.xlu0 %2612
        %2616 = vset.pattern.permute.xlu0 0
        %2617 = vperm.xlu0 %2616, %v2591
        %v2618 = vpop.permute.xlu0 %2617
        %2621 = vset.pattern.permute.xlu0 0
        %2622 = vperm.xlu0 %2621, %v2592
        %v2623 = vpop.permute.xlu0 %2622
        %v2625 = vmul.f32 %v2485, %v2608
        %v2626 = vmul.f32 %v2486, %v2608
        %v2627 = vmul.f32 %v2487, %v2608
        %v2628 = vmul.f32 %v2488, %v2608
        %v2629 = vmul.f32 %v2489, %v2613
        %v2630 = vmul.f32 %v2490, %v2613
        %v2631 = vmul.f32 %v2491, %v2613
        %v2632 = vmul.f32 %v2492, %v2613
        %v2633 = vmul.f32 %v2493, %v2618
        %v2634 = vmul.f32 %v2494, %v2618
        %v2635 = vmul.f32 %v2495, %v2618
        %v2636 = vmul.f32 %v2496, %v2618
        %v2637 = vmul.f32 %v2497, %v2623
        %v2638 = vmul.f32 %v2498, %v2623
        %v2639 = vmul.f32 %v2499, %v2623
        %v2640 = vmul.f32 %v2500, %v2623
        %2642 = vset.pattern.permute.xlu0 0
        %2643 = vperm.xlu0 %2642, %v2601
        %v2644 = vpop.permute.xlu0 %2643
        %2647 = vset.pattern.permute.xlu0 0
        %2648 = vperm.xlu0 %2647, %v2602
        %v2649 = vpop.permute.xlu0 %2648
        %2652 = vset.pattern.permute.xlu0 0
        %2653 = vperm.xlu0 %2652, %v2603
        %v2654 = vpop.permute.xlu0 %2653
        %2657 = vset.pattern.permute.xlu0 0
        %2658 = vperm.xlu0 %2657, %v2604
        %v2659 = vpop.permute.xlu0 %2658
        %v2661 = vadd.f32 %v2625, %v2644
        %v2662 = vadd.f32 %v2626, %v2644
        %v2663 = vadd.f32 %v2627, %v2644
        %v2664 = vadd.f32 %v2628, %v2644
        %v2665 = vadd.f32 %v2629, %v2649
        %v2666 = vadd.f32 %v2630, %v2649
        %v2667 = vadd.f32 %v2631, %v2649
        %v2668 = vadd.f32 %v2632, %v2649
        %v2669 = vadd.f32 %v2633, %v2654
        %v2670 = vadd.f32 %v2634, %v2654
        %v2671 = vadd.f32 %v2635, %v2654
        %v2672 = vadd.f32 %v2636, %v2654
        %v2673 = vadd.f32 %v2637, %v2659
        %v2674 = vadd.f32 %v2638, %v2659
        %v2675 = vadd.f32 %v2639, %v2659
        %v2676 = vadd.f32 %v2640, %v2659
        %v2677 = vmax.f32 %v2661, 0.0
        %v2678 = vmax.f32 %v2662, 0.0
        %v2679 = vmax.f32 %v2663, 0.0
        %v2680 = vmax.f32 %v2664, 0.0
        %v2681 = vmax.f32 %v2665, 0.0
        %v2682 = vmax.f32 %v2666, 0.0
        %v2683 = vmax.f32 %v2667, 0.0
        %v2684 = vmax.f32 %v2668, 0.0
        %v2685 = vmax.f32 %v2669, 0.0
        %v2686 = vmax.f32 %v2670, 0.0
        %v2687 = vmax.f32 %v2671, 0.0
        %v2688 = vmax.f32 %v2672, 0.0
        %v2689 = vmax.f32 %v2673, 0.0
        %v2690 = vmax.f32 %v2674, 0.0
        %v2691 = vmax.f32 %v2675, 0.0
        %v2692 = vmax.f32 %v2676, 0.0
        %2693 = vst [vmem:[#allocation2 + $0x8] sm:$0xff] %v2677
        %2694 = vst [vmem:[#allocation2 + $0x10] sm:$0xff] %v2678
        %2695 = vst [vmem:[#allocation2 + $0x18] sm:$0xff] %v2679
        %2696 = vst [vmem:[#allocation2 + $0x20] sm:$0xff] %v2680
        %2697 = vst [vmem:[#allocation2 + $0x38] sm:$0xff] %v2681
        %2698 = vst [vmem:[#allocation2 + $0x40] sm:$0xff] %v2682
        %2699 = vst [vmem:[#allocation2 + $0x48] sm:$0xff] %v2683
        %2700 = vst [vmem:[#allocation2 + $0x50] sm:$0xff] %v2684
        %2701 = vst [vmem:[#allocation2 + $0x68] sm:$0xff] %v2685
        %2702 = vst [vmem:[#allocation2 + $0x70] sm:$0xff] %v2686
        %2703 = vst [vmem:[#allocation2 + $0x78] sm:$0xff] %v2687
        %2704 = vst [vmem:[#allocation2 + $0x80] sm:$0xff] %v2688
        %2705 = vst [vmem:[#allocation2 + $0x98] sm:$0xff] %v2689
        %2706 = vst [vmem:[#allocation2 + $0xa0] sm:$0xff] %v2690
        %2707 = vst [vmem:[#allocation2 + $0xa8] sm:$0xff] %v2691
        %2708 = vst [vmem:[#allocation2 + $0xb0] sm:$0xff] %v2692
      $region48: #{feature_network_cnn.1} parent=39 // pred_fallthru
        _
      %p2709 = scmp.eq.s32.totalorder %s16, 4
      // Predicated region
      $region49: #{feature_network_cnn.1} parent=39 // pred_check
        %p2710 = pneg %p2709
      $region50: #{feature_network_cnn.1} parent=39 // pred_check_branch
        %2712 = sbr.rel (%p2710) target = $region52
      $region51: #{feature_network_cnn.1} parent=39 // pred_region
        %v2713 = vld [vmem:[%s0] sm:$0x3]
        %v2714 = vld [vmem:[%s0 + $0x8] sm:$0x3]
        %v2715 = vld [vmem:[%s0 + $0x10] sm:$0x3]
        %v2716 = vld [vmem:[%s0 + $0x18] sm:$0x3]
        %v2717 = vadd.f32 %v2713, %v2485
        %v2718 = vadd.f32 %v2714, %v2486
        %v2719 = vadd.f32 %v2715, %v2487
        %v2720 = vadd.f32 %v2716, %v2488
        %v2725 = vcombine.low %v2717, %v2718
        %v2726 = vcombine.low %v2719, %v2720
        %v2728 = vunpack.c.l.s4 1983009808
        %v2729 = vunpack.c.0.s8 %v2728
        %v2730 = vlaneseq
        %v2731 = vshrl.u32 %v2730, 7
        %v2732 = vsub.s32 %v2729, %v2731
        %v2733 = vrot.slane %v2725, %v2732
        %v2735 = vunpack.c.l.s4 1983009808
        %v2736 = vunpack.c.0.s8 %v2735
        %v2737 = vlaneseq
        %v2738 = vshrl.u32 %v2737, 7
        %v2739 = vsub.s32 %v2736, %v2738
        %v2740 = vrot.slane %v2726, %v2739
        %v2741 = vcombine.low %v2733, %v2740
        %2743 = vst [vmem:[%s5] sm:$0xff] %v2741
      $region52: #{feature_network_cnn.1} parent=39 // pred_fallthru
        _
      // Predicated region
      $region53: #{feature_network_cnn.1} parent=39 // pred_check
        %p2744 = pneg %p149
      $region54: #{feature_network_cnn.1} parent=39 // pred_check_branch
        %2746 = sbr.rel (%p2744) target = $region56
      $region55: #{feature_network_cnn.1} parent=39 // pred_region
        _
      $region56: #{feature_network_cnn.1} parent=39 // pred_fallthru
        _
      // Predicated region
      $region57: #{feature_network_cnn.1} parent=39 // pred_check
        %p2747 = pneg %p149
      $region58: #{feature_network_cnn.1} parent=39 // pred_check_branch
        %2749 = sbr.rel (%p2747) target = $region60
      $region59: #{feature_network_cnn.1} parent=39 // pred_region
        _
      $region60: #{feature_network_cnn.1} parent=39 // pred_fallthru
        _
    $region40: #{feature_network_cnn.1} parent=5 // pred_fallthru
      _
    %p2750 = scmp.le.s32.totalorder 2, %s11
    // Predicated region
    $region61: #{feature_network_cnn.1} parent=5 // pred_check
      %p2751 = pneg %p2750
    $region62: #{feature_network_cnn.1} parent=5 // pred_check_branch
      %2753 = sbr.rel (%p2751) target = $region64
    $region63: #{feature_network_cnn.1} parent=5 // pred_region
      %s2754 = ssub.s32 %s11, 2
    $region64: #{feature_network_cnn.1} parent=5 // pred_fallthru
      _
  $region6: #{feature_network_cnn.1} parent=0 // loop_footer
    %s15 = sadd.s32 1, %s11
  $region7: #{feature_network_cnn.1} parent=0 // loop_footer_branch
    %10 = sbr.rel target = $region3
  $region8: #{feature_network_cnn.1} parent=0 // loop_exit
    _

</llo_original>
